<compile_context>
chip_gen: v6e
topology: v6e:2x2x1
jax: 0.10.0
libtpu: 0.0.40
codegen_flags: <defaults>
</compile_context>

<pallas_src>
import jax
import jax.numpy as jnp
from jax.experimental import pallas as pl
from jax.experimental.pallas import tpu as pltpu


# ----------------------------------------------------------------------------
# Kernel: one batch tile (B_tile images) per grid step.
# Activations are packed lane-dense as (rows, W*C); per-image padded row blocks of
# height S = H2+2 are stacked along the sublane axis.
# ----------------------------------------------------------------------------
def _up_double_conv_kernel(x1_ref, x2_ref, ahpb_ref, bwp_ref,
                           t12_ref, t3_ref, b1_ref, b2_ref,
                           o_ref, xpad_ref, midpad_ref):
    b_tile, h1, _ = x1_ref.shape
    _, h2, w2c2 = x2_ref.shape
    s = h2 + 2                      # padded rows per image (1-row conv halo top/bottom)
    total = b_tile * s
    m = total - 2                   # matmul M rows (includes 2 garbage rows per seam)

    # Zero the conv halo rows once; scratch persists across grid steps and the halo
    # rows are never overwritten afterwards (no per-step memset).
    @pl.when(pl.program_id(0) == 0)
    def _init():
        xpad_ref[...] = jnp.zeros_like(xpad_ref)
        midpad_ref[...] = jnp.zeros_like(midpad_ref)

    # --- bilinear upsample (align_corners) + F.pad of x1: two small matmuls.  The pad
    #     and the conv halo are zero rows/cols folded into Bwp / AhpB (AhpB is
    #     block-diagonal over the batch tile), so the result drops straight into the slab.
    x1_all = x1_ref[...].astype(jnp.float32).reshape(b_tile * h1, -1)      # (Bt*H1, W1*C1)
    x1w = jnp.dot(x1_all, bwp_ref[...], preferred_element_type=jnp.float32)
    x1up = jnp.dot(ahpb_ref[...], x1w, preferred_element_type=jnp.float32)  # (Bt*S, W2*C1)

    # --- stage the channel concat [x2 | up(x1)] into one padded VMEM slab (no HBM pad,
    #     no concatenated tensor in HBM).
    xpad_ref[:, w2c2:] = x1up
    for b in range(b_tile):
        xpad_ref[b * s + 1:b * s + 1 + h2, :w2c2] = x2_ref[b].astype(jnp.float32)

    # --- conv1 + bias + LeakyReLU(0.1): 3 row-shifted Toeplitz matmuls over the whole
    #     batched slab, single K = W*(C1+C2) weight, bf16 MXU operands, f32 accumulate.
    acc = jnp.dot(xpad_ref[0:m, :].astype(jnp.bfloat16), t12_ref[0],
                  preferred_element_type=jnp.float32) + b1_ref[...]
    for dy in (1, 2):
        acc += jnp.dot(xpad_ref[dy:dy + m, :].astype(jnp.bfloat16), t12_ref[dy],
                       preferred_element_type=jnp.float32)
    mid = jnp.where(acc >= 0, acc, 0.1 * acc)

    # --- intermediate activation stays in VMEM; drop the 2 cross-image garbage rows per
    #     seam by storing only the valid H2-row window per image (halo rows stay zero).
    for b in range(b_tile):
        midpad_ref[b * s + 1:b * s + 1 + h2, :] = mid[b * s:b * s + h2]

    # --- conv2 + bias + LeakyReLU(0.1).
    acc2 = jnp.dot(midpad_ref[0:m, :].astype(jnp.bfloat16), t3_ref[0],
                   preferred_element_type=jnp.float32) + b2_ref[...]
    for dy in (1, 2):
        acc2 += jnp.dot(midpad_ref[dy:dy + m, :].astype(jnp.bfloat16), t3_ref[dy],
                        preferred_element_type=jnp.float32)
    out = jnp.where(acc2 >= 0, acc2, 0.1 * acc2)

    # Lane-dense (W2*Cout = multiple of 128) per-image stores, skipping seam rows.
    for b in range(b_tile):
        o_ref[b, :, :] = out[b * s:b * s + h2].astype(o_ref.dtype)


# ----------------------------------------------------------------------------
# Trace-time preprocessing (plain JAX, tiny arrays) — computed ONCE per weight set.
# ----------------------------------------------------------------------------
def _align_corners_matrix(in_size, out_size):
    """A[o, i]: bilinear interpolation weights with align_corners=True."""
    if in_size == 1:
        return jnp.ones((out_size, 1), jnp.float32)
    src = jnp.arange(out_size, dtype=jnp.float32) * ((in_size - 1) / (out_size - 1))
    i0 = jnp.clip(jnp.floor(src).astype(jnp.int32), 0, in_size - 2)
    frac = src - i0.astype(jnp.float32)
    eye = jnp.eye(in_size, dtype=jnp.float32)
    return (1.0 - frac)[:, None] * eye[i0] + frac[:, None] * eye[i0 + 1]


def _upsample_pad_matrices(h1, w1, c1, h2, w2):
    """Fold 2x bilinear upsample (align_corners) + F.pad + conv row-halo into matmuls."""
    up_h, up_w = 2 * h1, 2 * w1
    diff_y, diff_x = h2 - up_h, w2 - up_w
    assert diff_y >= 0 and diff_x >= 0, "x2 must be at least as large as upsampled x1"
    top, left = diff_y // 2, diff_x // 2
    ah = _align_corners_matrix(h1, up_h)                                   # (2*h1, h1)
    aw = _align_corners_matrix(w1, up_w)                                   # (2*w1, w1)
    ahp = jnp.zeros((h2 + 2, h1), jnp.float32).at[1 + top:1 + top + up_h].set(ah)
    awp = jnp.zeros((w2, w1), jnp.float32).at[left:left + up_w].set(aw)
    # Bwp[v*c1 + c, w*c1 + c'] = Awp[w, v] * (c == c')
    bwp = jnp.kron(awp, jnp.eye(c1, dtype=jnp.float32)).T                  # (w1*c1, w2*c1)
    return ahp, bwp


def _toeplitz_weights(w_hwio, width):
    """Fold 3x3 conv weights (one input-channel group) into row-Toeplitz matmul weights.

    T[dy, v*Cin + c, w*Cout + o] = w_hwio[dy, v - w + 1, c, o] (0 elsewhere) so that
    out[h] = sum_dy x_padded_rows[h + dy] @ T[dy] is a SAME (pad=1) cross-correlation.
    """
    kh, kw, cg, co = w_hwio.shape
    v = jnp.arange(width)
    w = jnp.arange(width)
    dx = jnp.arange(kw)
    ind = ((v[None, :, None] - w[None, None, :] + 1) == dx[:, None, None]).astype(w_hwio.dtype)
    t = jnp.einsum('xvw,yxco->yvcwo', ind, w_hwio)                         # (kh, W, Cin, W, Co)
    return t.reshape(kh, width * cg, width * co)


def _pick_b_tile(n, h2):
    """Images per grid step: target >=128 MXU rows, keep >=2 grid tiles when affordable."""
    s = h2 + 2
    bt = min(n, max(1, -(-128 // s)))
    # v7x megacore: prefer >=2 parallel grid tiles if each still feeds >=128 rows.
    if bt == n and n >= 2 and (-(-n // 2)) * s >= 128:
        bt = -(-n // 2)
    return bt


def prepare_up(params, x1_shape, x2_shape, compute_dtype=jnp.bfloat16):
    """Precompute interpolation matrices, Toeplitz weights and packed biases (once)."""
    n, c1, h1, w1 = x1_shape
    _, c2, h2, w2 = x2_shape
    wt1, b1, wt2, b2 = params["w1"], params["b1"], params["w2"], params["b2"]
    cin = c1 + c2
    cmid = wt1.shape[3]
    cout = wt2.shape[3]
    assert wt1.shape == (3, 3, cin, cmid) and wt2.shape == (3, 3, cmid, cout)

    b_tile = _pick_b_tile(n, h2)
    ahp, bwp = _upsample_pad_matrices(h1, w1, c1, h2, w2)
    ahpb = jnp.kron(jnp.eye(b_tile, dtype=jnp.float32), ahp)   # block-diag over batch tile

    # conv1: channel concat [x2 | up(x1)] folded into one K = W*(C2+C1) Toeplitz weight.
    t12 = jnp.concatenate(
        [_toeplitz_weights(wt1[:, :, :c2, :], w2),             # x2 (skip) channel group
         _toeplitz_weights(wt1[:, :, c2:, :], w2)],             # upsampled-x1 channel group
        axis=1).astype(compute_dtype)
    t3 = _toeplitz_weights(wt2, w2).astype(compute_dtype)
    b1p = jnp.tile(b1, w2).reshape(1, w2 * cmid).astype(jnp.float32)
    b2p = jnp.tile(b2, w2).reshape(1, w2 * cout).astype(jnp.float32)
    return {"ahpb": ahpb, "bwp": bwp, "t12": t12, "t3": t3, "b1p": b1p, "b2p": b2p}


# ----------------------------------------------------------------------------
# Public forward: NCHW in / NCHW out, matching `up.forward(x1, x2)`.
# ----------------------------------------------------------------------------
@jax.jit
def up_forward(x1_nchw, x2_nchw, prep):
    n, c1, h1, w1 = x1_nchw.shape
    _, c2, h2, w2 = x2_nchw.shape
    s = h2 + 2
    b_tile = prep["ahpb"].shape[0] // s
    cmid = prep["b1p"].shape[1] // w2
    cout = prep["b2p"].shape[1] // w2
    cin = c1 + c2

    # NCHW -> lane-dense (N, H, W*C) packing.
    x1f = jnp.transpose(x1_nchw, (0, 2, 3, 1)).reshape(n, h1, w1 * c1)
    x2f = jnp.transpose(x2_nchw, (0, 2, 3, 1)).reshape(n, h2, w2 * c2)

    n_tiles = -(-n // b_tile)
    n_pad = n_tiles * b_tile
    if n_pad != n:
        x1f = jnp.pad(x1f, ((0, n_pad - n), (0, 0), (0, 0)))
        x2f = jnp.pad(x2f, ((0, n_pad - n), (0, 0), (0, 0)))

    flops = 2 * n_pad * h2 * w2 * 9 * (cin * cmid + cmid * cout)
    bytes_accessed = (4 * n_pad * (h1 * w1 * c1 + h2 * w2 * c2 + h2 * w2 * cout)
                      + 2 * (prep["t12"].size + prep["t3"].size))

    out_flat = pl.pallas_call(
        _up_double_conv_kernel,
        out_shape=jax.ShapeDtypeStruct((n_pad, h2, w2 * cout), x2_nchw.dtype),
        grid=(n_tiles,),
        in_specs=[
            pl.BlockSpec((b_tile, h1, w1 * c1), lambda i: (i, 0, 0)),        # x1 (packed)
            pl.BlockSpec((b_tile, h2, w2 * c2), lambda i: (i, 0, 0)),        # x2 (packed)
            pl.BlockSpec((b_tile * s, b_tile * h1), lambda i: (0, 0)),       # AhpB
            pl.BlockSpec((w1 * c1, w2 * c1), lambda i: (0, 0)),              # Bwp
            pl.BlockSpec((3, w2 * cin, w2 * cmid), lambda i: (0, 0, 0)),     # T12 (bf16)
            pl.BlockSpec((3, w2 * cmid, w2 * cout), lambda i: (0, 0, 0)),    # T3  (bf16)
            pl.BlockSpec((1, w2 * cmid), lambda i: (0, 0)),                  # bias1 (packed)
            pl.BlockSpec((1, w2 * cout), lambda i: (0, 0)),                  # bias2 (packed)
        ],
        out_specs=pl.BlockSpec((b_tile, h2, w2 * cout), lambda i: (i, 0, 0)),
        scratch_shapes=[
            pltpu.VMEM((b_tile * s, w2 * cin), jnp.float32),    # padded [x2 | up(x1)] slab
            pltpu.VMEM((b_tile * s, w2 * cmid), jnp.float32),   # padded mid-activation slab
        ],
        compiler_params=pltpu.CompilerParams(dimension_semantics=("parallel",)),
        cost_estimate=pl.CostEstimate(flops=flops, transcendentals=0,
                                      bytes_accessed=bytes_accessed),
    )(x1f, x2f, prep["ahpb"], prep["bwp"], prep["t12"], prep["t3"],
      prep["b1p"], prep["b2p"])

    out = out_flat[:n].reshape(n, h2, w2, cout)
    return jnp.transpose(out, (0, 3, 1, 2))                                 # NHWC -> NCHW


# ----------------------------------------------------------------------------
# Parameters (HWIO weights, matching DoubleConv's two Conv2d + LeakyReLU(0.1)).
# ----------------------------------------------------------------------------
def init_up_params(key, in_ch, out_ch, dtype=jnp.float32):
    k1, k2, k3, k4 = jax.random.split(key, 4)
    fan1 = in_ch * 9
    fan2 = out_ch * 9
    w1 = jax.random.normal(k1, (3, 3, in_ch, out_ch), dtype) * (1.0 / fan1) ** 0.5
    b1 = jax.random.normal(k2, (out_ch,), dtype) * 0.01
    w2 = jax.random.normal(k3, (3, 3, out_ch, out_ch), dtype) * (1.0 / fan2) ** 0.5
    b2 = jax.random.normal(k4, (out_ch,), dtype) * 0.01
    return {"w1": w1, "b1": b1, "w2": w2, "b2": b2}


# ----------------------------------------------------------------------------
# Pure-JAX reference (independent path: gather-based bilinear + lax.conv, f32).
# ----------------------------------------------------------------------------
def _ref_upsample_bilinear_align_corners(x_nhwc, out_h, out_w):
    _, h, w, _ = x_nhwc.shape

    def idx(in_size, out_size):
        if in_size == 1:
            z = jnp.zeros((out_size,), jnp.int32)
            return z, z, jnp.zeros((out_size,), jnp.float32)
        src = jnp.arange(out_size, dtype=jnp.float32) * ((in_size - 1) / (out_size - 1))
        i0 = jnp.clip(jnp.floor(src).astype(jnp.int32), 0, in_size - 2)
        return i0, i0 + 1, src - i0.astype(jnp.float32)

    y0, y1, fy = idx(h, out_h)
    x0, x1, fx = idx(w, out_w)
    rows = (x_nhwc[:, y0] * (1 - fy)[None, :, None, None]
            + x_nhwc[:, y1] * fy[None, :, None, None])
    return (rows[:, :, x0] * (1 - fx)[None, None, :, None]
            + rows[:, :, x1] * fx[None, None, :, None])


def _reference_up_forward(x1_nchw, x2_nchw, params):
    x1 = jnp.transpose(x1_nchw, (0, 2, 3, 1))
    x2 = jnp.transpose(x2_nchw, (0, 2, 3, 1))
    _, h1, w1, _ = x1.shape
    _, h2, w2, _ = x2.shape
    up = _ref_upsample_bilinear_align_corners(x1, 2 * h1, 2 * w1)
    dy, dx = h2 - 2 * h1, w2 - 2 * w1
    up = jnp.pad(up, ((0, 0), (dy // 2, dy - dy // 2), (dx // 2, dx - dx // 2), (0, 0)))
    x = jnp.concatenate([x2, up], axis=-1)

    def conv(z, w, b):
        y = jax.lax.conv_general_dilated(
            z, w, window_strides=(1, 1), padding="SAME",
            dimension_numbers=("NHWC", "HWIO", "NHWC"),
            precision=jax.lax.Precision.HIGHEST)
        y = y + b
        return jnp.where(y >= 0, y, 0.1 * y)

    x = conv(x, params["w1"], params["b1"])
    x = conv(x, params["w2"], params["b2"])
    return jnp.transpose(x, (0, 3, 1, 2))


if __name__ == "__main__":
    key = jax.random.PRNGKey(0)
    kx1, kx2, kp = jax.random.split(key, 3)

    # x1: deeper feature map (to be upsampled); x2: skip connection.
    N, C1, H1, W1 = 2, 4, 8, 8
    C2, H2, W2 = 4, 16, 16
    out_ch = 8
    in_ch = C1 + C2

    x1 = jax.random.normal(kx1, (N, C1, H1, W1), jnp.float32)
    x2 = jax.random.normal(kx2, (N, C2, H2, W2), jnp.float32)
    params = init_up_params(kp, in_ch, out_ch)

    prep = prepare_up(params, x1.shape, x2.shape)      # weight preprocessing, once
    out = up_forward(x1, x2, prep)
    out = jax.block_until_ready(out)

    ref = _reference_up_forward(x1, x2, params)
    assert out.shape == (N, out_ch, H2, W2)
    max_err = float(jnp.max(jnp.abs(out - ref)))
    # bf16 MXU operands vs. f32 HIGHEST-precision reference -> relaxed tolerance.
    assert jnp.allclose(out, ref, atol=5e-2, rtol=5e-2), max_err

    print("KERNEL_OK")
</pallas_src>

<mosaic_0001>
module attributes {stable_mosaic.version = 11 : i64} {
  func.func @_up_double_conv_kernel(%arg0: i32, %arg1: memref<2x8x32xf32, #tpu.memory_space<vmem>>, %arg2: memref<2x16x64xf32, #tpu.memory_space<vmem>>, %arg3: memref<36x16xf32, #tpu.memory_space<vmem>>, %arg4: memref<32x64xf32, #tpu.memory_space<vmem>>, %arg5: memref<3x128x128xbf16, #tpu.memory_space<vmem>>, %arg6: memref<3x128x128xbf16, #tpu.memory_space<vmem>>, %arg7: memref<1x128xf32, #tpu.memory_space<vmem>>, %arg8: memref<1x128xf32, #tpu.memory_space<vmem>>, %arg9: memref<2x16x128xf32, #tpu.memory_space<vmem>>, %arg10: memref<36x128xf32, #tpu.memory_space<vmem>>, %arg11: memref<36x128xf32, #tpu.memory_space<vmem>>) attributes {dimension_semantics = [#tpu.dimension_semantics<parallel>], iteration_bounds = array<i64: 1>, scalar_prefetch = 0 : i64, scratch_operands = 2 : i64, tpu.core_type = #tpu.core_type<tc>, window_params = [{transform_indices = @transform_0, window_bounds = array<i64: 2, 8, 32>}, {transform_indices = @transform_1, window_bounds = array<i64: 2, 16, 64>}, {pipeline_mode = #tpu.pipeline_mode<synchronous>, transform_indices = @transform_2, window_bounds = array<i64: 36, 16>}, {pipeline_mode = #tpu.pipeline_mode<synchronous>, transform_indices = @transform_3, window_bounds = array<i64: 32, 64>}, {pipeline_mode = #tpu.pipeline_mode<synchronous>, transform_indices = @transform_4, window_bounds = array<i64: 3, 128, 128>}, {pipeline_mode = #tpu.pipeline_mode<synchronous>, transform_indices = @transform_5, window_bounds = array<i64: 3, 128, 128>}, {pipeline_mode = #tpu.pipeline_mode<synchronous>, transform_indices = @transform_6, window_bounds = array<i64: 1, 128>}, {pipeline_mode = #tpu.pipeline_mode<synchronous>, transform_indices = @transform_7, window_bounds = array<i64: 1, 128>}, {transform_indices = @transform_8, window_bounds = array<i64: 2, 16, 128>}]} {
    %c0_i32 = arith.constant 0 : i32
    %0 = arith.cmpi eq, %arg0, %c0_i32 : i32
    %1 = arith.extui %0 : i1 to i32
    %c0_i32_0 = arith.constant 0 : i32
    %2 = arith.cmpi ne, %1, %c0_i32_0 : i32
    scf.if %2 {
      %cst_70 = arith.constant 0.000000e+00 : f32
      %78 = vector.broadcast %cst_70 : f32 to vector<36x128xf32>
      %c0_71 = arith.constant 0 : index
      %c0_72 = arith.constant 0 : index
      %79 = vector.load %arg10[%c0_71, %c0_72] : memref<36x128xf32, #tpu.memory_space<vmem>>, vector<36x128xf32>
      tpu.vector_store %arg10[%c0_71, %c0_72], %78 {strides = array<i32>} : memref<36x128xf32, #tpu.memory_space<vmem>>, vector<36x128xf32>,
      %cst_73 = arith.constant 0.000000e+00 : f32
      %80 = vector.broadcast %cst_73 : f32 to vector<36x128xf32>
      %c0_74 = arith.constant 0 : index
      %c0_75 = arith.constant 0 : index
      %81 = vector.load %arg11[%c0_74, %c0_75] : memref<36x128xf32, #tpu.memory_space<vmem>>, vector<36x128xf32>
      tpu.vector_store %arg11[%c0_74, %c0_75], %80 {strides = array<i32>} : memref<36x128xf32, #tpu.memory_space<vmem>>, vector<36x128xf32>,
    } else {
    }
    %c0 = arith.constant 0 : index
    %c0_1 = arith.constant 0 : index
    %c0_2 = arith.constant 0 : index
    %3 = vector.load %arg1[%c0, %c0_1, %c0_2] : memref<2x8x32xf32, #tpu.memory_space<vmem>>, vector<2x8x32xf32>
    %4 = vector.shape_cast %3 : vector<2x8x32xf32> to vector<16x32xf32>
    %c0_3 = arith.constant 0 : index
    %c0_4 = arith.constant 0 : index
    %5 = vector.load %arg4[%c0_3, %c0_4] : memref<32x64xf32, #tpu.memory_space<vmem>>, vector<32x64xf32>
    %cst = arith.constant dense<0.000000e+00> : vector<16x64xf32>
    %6 = tpu.matmul %4, %5, %cst {dimension_numbers = #tpu.dot_dimension_numbers<[1], [0], [0], [1], [0, 0, 1, 1], [], []>} : vector<16x32xf32>, vector<32x64xf32>, vector<16x64xf32> -> vector<16x64xf32>
    %c0_5 = arith.constant 0 : index
    %c0_6 = arith.constant 0 : index
    %7 = vector.load %arg3[%c0_5, %c0_6] : memref<36x16xf32, #tpu.memory_space<vmem>>, vector<36x16xf32>
    %cst_7 = arith.constant dense<0.000000e+00> : vector<36x64xf32>
    %8 = tpu.matmul %7, %6, %cst_7 {dimension_numbers = #tpu.dot_dimension_numbers<[1], [0], [0], [1], [0, 0, 1, 1], [], []>} : vector<36x16xf32>, vector<16x64xf32>, vector<36x64xf32> -> vector<36x64xf32>
    %c0_8 = arith.constant 0 : index
    %c64 = arith.constant 64 : index
    %9 = vector.load %arg10[%c0_8, %c64] : memref<36x128xf32, #tpu.memory_space<vmem>>, vector<36x64xf32>
    tpu.vector_store %arg10[%c0_8, %c64], %8 {strides = array<i32>} : memref<36x128xf32, #tpu.memory_space<vmem>>, vector<36x64xf32>,
    %c0_9 = arith.constant 0 : index
    %c0_10 = arith.constant 0 : index
    %c0_11 = arith.constant 0 : index
    %10 = vector.load %arg2[%c0_9, %c0_10, %c0_11] : memref<2x16x64xf32, #tpu.memory_space<vmem>>, vector<1x16x64xf32>
    %11 = vector.shape_cast %10 : vector<1x16x64xf32> to vector<16x64xf32>
    %c1 = arith.constant 1 : index
    %c0_12 = arith.constant 0 : index
    %12 = vector.load %arg10[%c1, %c0_12] : memref<36x128xf32, #tpu.memory_space<vmem>>, vector<16x64xf32>
    tpu.vector_store %arg10[%c1, %c0_12], %11 {strides = array<i32>} : memref<36x128xf32, #tpu.memory_space<vmem>>, vector<16x64xf32>,
    %c1_13 = arith.constant 1 : index
    %c0_14 = arith.constant 0 : index
    %c0_15 = arith.constant 0 : index
    %13 = vector.load %arg2[%c1_13, %c0_14, %c0_15] : memref<2x16x64xf32, #tpu.memory_space<vmem>>, vector<1x16x64xf32>
    %14 = vector.shape_cast %13 : vector<1x16x64xf32> to vector<16x64xf32>
    %c19 = arith.constant 19 : index
    %c0_16 = arith.constant 0 : index
    %15 = vector.load %arg10[%c19, %c0_16] : memref<36x128xf32, #tpu.memory_space<vmem>>, vector<16x64xf32>
    tpu.vector_store %arg10[%c19, %c0_16], %14 {strides = array<i32>} : memref<36x128xf32, #tpu.memory_space<vmem>>, vector<16x64xf32>,
    %c0_17 = arith.constant 0 : index
    %c0_18 = arith.constant 0 : index
    %16 = vector.load %arg10[%c0_17, %c0_18] : memref<36x128xf32, #tpu.memory_space<vmem>>, vector<34x128xf32>
    %17 = arith.truncf %16 : vector<34x128xf32> to vector<34x128xbf16>
    %c0_19 = arith.constant 0 : index
    %c0_20 = arith.constant 0 : index
    %c0_21 = arith.constant 0 : index
    %18 = vector.load %arg5[%c0_19, %c0_20, %c0_21] : memref<3x128x128xbf16, #tpu.memory_space<vmem>>, vector<1x128x128xbf16>
    %19 = vector.shape_cast %18 : vector<1x128x128xbf16> to vector<128x128xbf16>
    %cst_22 = arith.constant dense<0.000000e+00> : vector<34x128xf32>
    %20 = tpu.matmul %17, %19, %cst_22 {dimension_numbers = #tpu.dot_dimension_numbers<[1], [0], [0], [1], [0, 0, 1, 1], [], []>} : vector<34x128xbf16>, vector<128x128xbf16>, vector<34x128xf32> -> vector<34x128xf32>
    %c0_23 = arith.constant 0 : index
    %c0_24 = arith.constant 0 : index
    %21 = vector.load %arg7[%c0_23, %c0_24] : memref<1x128xf32, #tpu.memory_space<vmem>>, vector<1x128xf32>
    %22 = vector.broadcast %21 : vector<1x128xf32> to vector<34x128xf32>
    %23 = arith.addf %20, %22 : vector<34x128xf32>
    %c1_25 = arith.constant 1 : index
    %c0_26 = arith.constant 0 : index
    %24 = vector.load %arg10[%c1_25, %c0_26] : memref<36x128xf32, #tpu.memory_space<vmem>>, vector<34x128xf32>
    %25 = arith.truncf %24 : vector<34x128xf32> to vector<34x128xbf16>
    %c1_27 = arith.constant 1 : index
    %c0_28 = arith.constant 0 : index
    %c0_29 = arith.constant 0 : index
    %26 = vector.load %arg5[%c1_27, %c0_28, %c0_29] : memref<3x128x128xbf16, #tpu.memory_space<vmem>>, vector<1x128x128xbf16>
    %27 = vector.shape_cast %26 : vector<1x128x128xbf16> to vector<128x128xbf16>
    %cst_30 = arith.constant dense<0.000000e+00> : vector<34x128xf32>
    %28 = tpu.matmul %25, %27, %cst_30 {dimension_numbers = #tpu.dot_dimension_numbers<[1], [0], [0], [1], [0, 0, 1, 1], [], []>} : vector<34x128xbf16>, vector<128x128xbf16>, vector<34x128xf32> -> vector<34x128xf32>
    %29 = arith.addf %23, %28 : vector<34x128xf32>
    %c2 = arith.constant 2 : index
    %c0_31 = arith.constant 0 : index
    %30 = vector.load %arg10[%c2, %c0_31] : memref<36x128xf32, #tpu.memory_space<vmem>>, vector<34x128xf32>
    %31 = arith.truncf %30 : vector<34x128xf32> to vector<34x128xbf16>
    %c2_32 = arith.constant 2 : index
    %c0_33 = arith.constant 0 : index
    %c0_34 = arith.constant 0 : index
    %32 = vector.load %arg5[%c2_32, %c0_33, %c0_34] : memref<3x128x128xbf16, #tpu.memory_space<vmem>>, vector<1x128x128xbf16>
    %33 = vector.shape_cast %32 : vector<1x128x128xbf16> to vector<128x128xbf16>
    %cst_35 = arith.constant dense<0.000000e+00> : vector<34x128xf32>
    %34 = tpu.matmul %31, %33, %cst_35 {dimension_numbers = #tpu.dot_dimension_numbers<[1], [0], [0], [1], [0, 0, 1, 1], [], []>} : vector<34x128xbf16>, vector<128x128xbf16>, vector<34x128xf32> -> vector<34x128xf32>
    %35 = arith.addf %29, %34 : vector<34x128xf32>
    %cst_36 = arith.constant 0.000000e+00 : f32
    %36 = vector.broadcast %cst_36 : f32 to vector<34x128xf32>
    %37 = arith.cmpf oge, %35, %36 : vector<34x128xf32>
    %cst_37 = arith.constant 1.000000e-01 : f32
    %38 = vector.broadcast %cst_37 : f32 to vector<34x128xf32>
    %39 = arith.mulf %38, %35 : vector<34x128xf32>
    %40 = arith.select %37, %35, %39 : vector<34x128xi1>, vector<34x128xf32>
    %41 = vector.extract_strided_slice %40 {offsets = [0, 0], sizes = [16, 128], strides = [1, 1]} : vector<34x128xf32> to vector<16x128xf32>
    %c1_38 = arith.constant 1 : index
    %c0_39 = arith.constant 0 : index
    %42 = vector.load %arg11[%c1_38, %c0_39] : memref<36x128xf32, #tpu.memory_space<vmem>>, vector<16x128xf32>
    tpu.vector_store %arg11[%c1_38, %c0_39], %41 {strides = array<i32>} : memref<36x128xf32, #tpu.memory_space<vmem>>, vector<16x128xf32>,
    %43 = vector.extract_strided_slice %40 {offsets = [18, 0], sizes = [16, 128], strides = [1, 1]} : vector<34x128xf32> to vector<16x128xf32>
    %c19_40 = arith.constant 19 : index
    %c0_41 = arith.constant 0 : index
    %44 = vector.load %arg11[%c19_40, %c0_41] : memref<36x128xf32, #tpu.memory_space<vmem>>, vector<16x128xf32>
    tpu.vector_store %arg11[%c19_40, %c0_41], %43 {strides = array<i32>} : memref<36x128xf32, #tpu.memory_space<vmem>>, vector<16x128xf32>,
    %c0_42 = arith.constant 0 : index
    %c0_43 = arith.constant 0 : index
    %45 = vector.load %arg11[%c0_42, %c0_43] : memref<36x128xf32, #tpu.memory_space<vmem>>, vector<34x128xf32>
    %46 = arith.truncf %45 : vector<34x128xf32> to vector<34x128xbf16>
    %c0_44 = arith.constant 0 : index
    %c0_45 = arith.constant 0 : index
    %c0_46 = arith.constant 0 : index
    %47 = vector.load %arg6[%c0_44, %c0_45, %c0_46] : memref<3x128x128xbf16, #tpu.memory_space<vmem>>, vector<1x128x128xbf16>
    %48 = vector.shape_cast %47 : vector<1x128x128xbf16> to vector<128x128xbf16>
    %cst_47 = arith.constant dense<0.000000e+00> : vector<34x128xf32>
    %49 = tpu.matmul %46, %48, %cst_47 {dimension_numbers = #tpu.dot_dimension_numbers<[1], [0], [0], [1], [0, 0, 1, 1], [], []>} : vector<34x128xbf16>, vector<128x128xbf16>, vector<34x128xf32> -> vector<34x128xf32>
    %c0_48 = arith.constant 0 : index
    %c0_49 = arith.constant 0 : index
    %50 = vector.load %arg8[%c0_48, %c0_49] : memref<1x128xf32, #tpu.memory_space<vmem>>, vector<1x128xf32>
    %51 = vector.broadcast %50 : vector<1x128xf32> to vector<34x128xf32>
    %52 = arith.addf %49, %51 : vector<34x128xf32>
    %c1_50 = arith.constant 1 : index
    %c0_51 = arith.constant 0 : index
    %53 = vector.load %arg11[%c1_50, %c0_51] : memref<36x128xf32, #tpu.memory_space<vmem>>, vector<34x128xf32>
    %54 = arith.truncf %53 : vector<34x128xf32> to vector<34x128xbf16>
    %c1_52 = arith.constant 1 : index
    %c0_53 = arith.constant 0 : index
    %c0_54 = arith.constant 0 : index
    %55 = vector.load %arg6[%c1_52, %c0_53, %c0_54] : memref<3x128x128xbf16, #tpu.memory_space<vmem>>, vector<1x128x128xbf16>
    %56 = vector.shape_cast %55 : vector<1x128x128xbf16> to vector<128x128xbf16>
    %cst_55 = arith.constant dense<0.000000e+00> : vector<34x128xf32>
    %57 = tpu.matmul %54, %56, %cst_55 {dimension_numbers = #tpu.dot_dimension_numbers<[1], [0], [0], [1], [0, 0, 1, 1], [], []>} : vector<34x128xbf16>, vector<128x128xbf16>, vector<34x128xf32> -> vector<34x128xf32>
    %58 = arith.addf %52, %57 : vector<34x128xf32>
    %c2_56 = arith.constant 2 : index
    %c0_57 = arith.constant 0 : index
    %59 = vector.load %arg11[%c2_56, %c0_57] : memref<36x128xf32, #tpu.memory_space<vmem>>, vector<34x128xf32>
    %60 = arith.truncf %59 : vector<34x128xf32> to vector<34x128xbf16>
    %c2_58 = arith.constant 2 : index
    %c0_59 = arith.constant 0 : index
    %c0_60 = arith.constant 0 : index
    %61 = vector.load %arg6[%c2_58, %c0_59, %c0_60] : memref<3x128x128xbf16, #tpu.memory_space<vmem>>, vector<1x128x128xbf16>
    %62 = vector.shape_cast %61 : vector<1x128x128xbf16> to vector<128x128xbf16>
    %cst_61 = arith.constant dense<0.000000e+00> : vector<34x128xf32>
    %63 = tpu.matmul %60, %62, %cst_61 {dimension_numbers = #tpu.dot_dimension_numbers<[1], [0], [0], [1], [0, 0, 1, 1], [], []>} : vector<34x128xbf16>, vector<128x128xbf16>, vector<34x128xf32> -> vector<34x128xf32>
    %64 = arith.addf %58, %63 : vector<34x128xf32>
    %cst_62 = arith.constant 0.000000e+00 : f32
    %65 = vector.broadcast %cst_62 : f32 to vector<34x128xf32>
    %66 = arith.cmpf oge, %64, %65 : vector<34x128xf32>
    %cst_63 = arith.constant 1.000000e-01 : f32
    %67 = vector.broadcast %cst_63 : f32 to vector<34x128xf32>
    %68 = arith.mulf %67, %64 : vector<34x128xf32>
    %69 = arith.select %66, %64, %68 : vector<34x128xi1>, vector<34x128xf32>
    %70 = vector.extract_strided_slice %69 {offsets = [0, 0], sizes = [16, 128], strides = [1, 1]} : vector<34x128xf32> to vector<16x128xf32>
    %c0_64 = arith.constant 0 : index
    %c0_65 = arith.constant 0 : index
    %c0_66 = arith.constant 0 : index
    %71 = vector.load %arg9[%c0_64, %c0_65, %c0_66] : memref<2x16x128xf32, #tpu.memory_space<vmem>>, vector<1x16x128xf32>
    %72 = vector.shape_cast %71 : vector<1x16x128xf32> to vector<16x128xf32>
    %73 = vector.shape_cast %70 : vector<16x128xf32> to vector<1x16x128xf32>
    tpu.vector_store %arg9[%c0_64, %c0_65, %c0_66], %73 {strides = array<i32>} : memref<2x16x128xf32, #tpu.memory_space<vmem>>, vector<1x16x128xf32>,
    %74 = vector.extract_strided_slice %69 {offsets = [18, 0], sizes = [16, 128], strides = [1, 1]} : vector<34x128xf32> to vector<16x128xf32>
    %c1_67 = arith.constant 1 : index
    %c0_68 = arith.constant 0 : index
    %c0_69 = arith.constant 0 : index
    %75 = vector.load %arg9[%c1_67, %c0_68, %c0_69] : memref<2x16x128xf32, #tpu.memory_space<vmem>>, vector<1x16x128xf32>
    %76 = vector.shape_cast %75 : vector<1x16x128xf32> to vector<16x128xf32>
    %77 = vector.shape_cast %74 : vector<16x128xf32> to vector<1x16x128xf32>
    tpu.vector_store %arg9[%c1_67, %c0_68, %c0_69], %77 {strides = array<i32>} : memref<2x16x128xf32, #tpu.memory_space<vmem>>, vector<1x16x128xf32>,
    return
  }
  func.func @transform_0(%arg0: i32) -> (i32, i32, i32) {
    %c0_i32 = arith.constant 0 : i32
    %c0_i32_0 = arith.constant 0 : i32
    %c0_i32_1 = arith.constant 0 : i32
    return %arg0, %c0_i32, %c0_i32_0 : i32, i32, i32
  }
  func.func @transform_1(%arg0: i32) -> (i32, i32, i32) {
    %c0_i32 = arith.constant 0 : i32
    %c0_i32_0 = arith.constant 0 : i32
    %c0_i32_1 = arith.constant 0 : i32
    return %arg0, %c0_i32, %c0_i32_0 : i32, i32, i32
  }
  func.func @transform_2(%arg0: i32) -> (i32, i32) {
    %c0_i32 = arith.constant 0 : i32
    %c0_i32_0 = arith.constant 0 : i32
    %c0_i32_1 = arith.constant 0 : i32
    return %c0_i32, %c0_i32_0 : i32, i32
  }
  func.func @transform_3(%arg0: i32) -> (i32, i32) {
    %c0_i32 = arith.constant 0 : i32
    %c0_i32_0 = arith.constant 0 : i32
    %c0_i32_1 = arith.constant 0 : i32
    return %c0_i32, %c0_i32_0 : i32, i32
  }
  func.func @transform_4(%arg0: i32) -> (i32, i32, i32) {
    %c0_i32 = arith.constant 0 : i32
    %c0_i32_0 = arith.constant 0 : i32
    %c0_i32_1 = arith.constant 0 : i32
    %c0_i32_2 = arith.constant 0 : i32
    return %c0_i32, %c0_i32_0, %c0_i32_1 : i32, i32, i32
  }
  func.func @transform_5(%arg0: i32) -> (i32, i32, i32) {
    %c0_i32 = arith.constant 0 : i32
    %c0_i32_0 = arith.constant 0 : i32
    %c0_i32_1 = arith.constant 0 : i32
    %c0_i32_2 = arith.constant 0 : i32
    return %c0_i32, %c0_i32_0, %c0_i32_1 : i32, i32, i32
  }
  func.func @transform_6(%arg0: i32) -> (i32, i32) {
    %c0_i32 = arith.constant 0 : i32
    %c0_i32_0 = arith.constant 0 : i32
    %c0_i32_1 = arith.constant 0 : i32
    return %c0_i32, %c0_i32_0 : i32, i32
  }
  func.func @transform_7(%arg0: i32) -> (i32, i32) {
    %c0_i32 = arith.constant 0 : i32
    %c0_i32_0 = arith.constant 0 : i32
    %c0_i32_1 = arith.constant 0 : i32
    return %c0_i32, %c0_i32_0 : i32, i32
  }
  func.func @transform_8(%arg0: i32) -> (i32, i32, i32) {
    %c0_i32 = arith.constant 0 : i32
    %c0_i32_0 = arith.constant 0 : i32
    %c0_i32_1 = arith.constant 0 : i32
    return %arg0, %c0_i32, %c0_i32_0 : i32, i32, i32
  }
}

</mosaic_0001>

<llo_original>
// kernel: up_forward.1
$region0: #{up_forward.1}
  #allocation0 [shape = 'u32[]', space=smem, size = 0x4, offset = 0x4, fixed_abs, tag = 'smem constant byte address 0x4 - core index']
  #allocation1 [shape = 'u32[144,128]{1,0:T(1,128)}', space=vmem, size = 0x12000, scoped, tag = 'internal scratch']
  #allocation2 [shape = 'f32[36,128]{1,0:T(8,128)}', space=vmem, size = 0x5000, scoped, tag = 'scratch operand']
  #allocation3 [shape = 'f32[36,128]{1,0:T(8,128)}', space=vmem, size = 0x5000, scoped, tag = 'scratch operand']
  %s0 = inlined_call_operand.vmem [shape: f32[2,8,32], index: 0, kind: input, shape index: {}]
  %s1 = inlined_call_operand.vmem [shape: f32[2,16,64], index: 1, kind: input, shape index: {}]
  %s2 = inlined_call_operand.vmem [shape: f32[36,16], index: 2, kind: input, shape index: {}]
  %s3 = inlined_call_operand.vmem [shape: f32[32,64], index: 3, kind: input, shape index: {}]
  %s4 = inlined_call_operand.vmem [shape: bf16[3,128,128], index: 4, kind: input, shape index: {}]
  %s5 = inlined_call_operand.vmem [shape: bf16[3,128,128], index: 5, kind: input, shape index: {}]
  %s6 = inlined_call_operand.vmem [shape: f32[1,128], index: 6, kind: input, shape index: {}]
  %s7 = inlined_call_operand.vmem [shape: f32[1,128], index: 7, kind: input, shape index: {}]
  %s8 = inlined_call_operand.vmem [shape: f32[2,16,128], index: 8, kind: output, shape index: {}]
  %s9 = sld [smem:[#allocation0]]
  $region46: #{up_forward.1} parent=0
    _
  %s11 = ssub.s32 1, %s9
  %s12 = scalar_select 0, %s11, %s9
  // Predicated region
  $region2: #{up_forward.1} parent=0 // pred_check
    _
  $region3: #{up_forward.1} parent=0 // pred_check_branch
    %14 = sbr.rel (0) target = $region5
  $region4: #{up_forward.1} parent=0 // pred_region
    _
  $region5: #{up_forward.1} parent=0 // pred_fallthru
    _
  // Predicated region
  $region6: #{up_forward.1} parent=0 // pred_check
    _
  $region7: #{up_forward.1} parent=0 // pred_check_branch
    %16 = sbr.rel (0) target = $region9
  $region8: #{up_forward.1} parent=0 // pred_region
    _
  $region9: #{up_forward.1} parent=0 // pred_fallthru
    _
  // Predicated region
  $region10: #{up_forward.1} parent=0 // pred_check
    _
  $region11: #{up_forward.1} parent=0 // pred_check_branch
    %18 = sbr.rel (0) target = $region13
  $region12: #{up_forward.1} parent=0 // pred_region
    _
  $region13: #{up_forward.1} parent=0 // pred_fallthru
    _
  // Predicated region
  $region14: #{up_forward.1} parent=0 // pred_check
    _
  $region15: #{up_forward.1} parent=0 // pred_check_branch
    %20 = sbr.rel (0) target = $region17
  $region16: #{up_forward.1} parent=0 // pred_region
    _
  $region17: #{up_forward.1} parent=0 // pred_fallthru
    _
  // Predicated region
  $region18: #{up_forward.1} parent=0 // pred_check
    _
  $region19: #{up_forward.1} parent=0 // pred_check_branch
    %22 = sbr.rel (0) target = $region21
  $region20: #{up_forward.1} parent=0 // pred_region
    _
  $region21: #{up_forward.1} parent=0 // pred_fallthru
    _
  // Predicated region
  $region22: #{up_forward.1} parent=0 // pred_check
    _
  $region23: #{up_forward.1} parent=0 // pred_check_branch
    %24 = sbr.rel (0) target = $region25
  $region24: #{up_forward.1} parent=0 // pred_region
    _
  $region25: #{up_forward.1} parent=0 // pred_fallthru
    _
  // Predicated region
  $region26: #{up_forward.1} parent=0 // pred_check
    _
  $region27: #{up_forward.1} parent=0 // pred_check_branch
    %26 = sbr.rel (0) target = $region29
  $region28: #{up_forward.1} parent=0 // pred_region
    _
  $region29: #{up_forward.1} parent=0 // pred_fallthru
    _
  // Predicated region
  $region30: #{up_forward.1} parent=0 // pred_check
    _
  $region31: #{up_forward.1} parent=0 // pred_check_branch
    %28 = sbr.rel (0) target = $region33
  $region32: #{up_forward.1} parent=0 // pred_region
    _
  $region33: #{up_forward.1} parent=0 // pred_fallthru
    _
  %p30 = scmp.eq.s32.totalorder 0, 0
  // Predicated region
  $region34: #{up_forward.1} parent=0 // pred_check
    %p31 = pneg %p30
  $region35: #{up_forward.1} parent=0 // pred_check_branch
    %33 = sbr.rel (%p31) target = $region37
  $region36: #{up_forward.1} parent=0 // pred_region
    %34 = vst [vmem:[#allocation2] sm:$0xff] 0.0
    %35 = vst [vmem:[#allocation2 + $0x8] sm:$0xff] 0.0
    %36 = vst [vmem:[#allocation2 + $0x10] sm:$0xff] 0.0
    %37 = vst [vmem:[#allocation2 + $0x18] sm:$0xff] 0.0
    %38 = vst [vmem:[#allocation2 + $0x20] sm:$0xf] 0.0
    %39 = vst [vmem:[#allocation3] sm:$0xff] 0.0
    %40 = vst [vmem:[#allocation3 + $0x8] sm:$0xff] 0.0
    %41 = vst [vmem:[#allocation3 + $0x10] sm:$0xff] 0.0
    %42 = vst [vmem:[#allocation3 + $0x18] sm:$0xff] 0.0
    %43 = vst [vmem:[#allocation3 + $0x20] sm:$0xf] 0.0
  $region37: #{up_forward.1} parent=0 // pred_fallthru
    _
  %v44 = vld [vmem:[%s0] sm:$0xff]
  %v45 = vld [vmem:[%s0 + $0x8] sm:$0xff]
  %v46 = vld [vmem:[%s3] sm:$0xff]
  %v47 = vld [vmem:[%s3 + $0x8] sm:$0xff]
  %v48 = vld [vmem:[%s3 + $0x10] sm:$0xff]
  %v49 = vld [vmem:[%s3 + $0x18] sm:$0xff]
  %vm50 = vcmask 261120
  %v52 = vsel %vm50, %v44, 0
  %v55 = vsel %vm50, %v45, 0
  %57 = vmatprep.subr.mxu0 0.0
  %58 = vmatpush1.msra.mxu0 0.0
  %59 = vmatprep.subr.mxu0 0.0
  %60 = vmatpush1.msra.mxu0 0.0
  %61 = vmatprep.subr.mxu0 0.0
  %62 = vmatpush1.msra.mxu0 0.0
  %63 = vmatprep.subr.mxu0 0.0
  %64 = vmatpush1.msra.mxu0 0.0
  %65 = vmatprep.subr.mxu0 0.0
  %66 = vmatpush1.msra.mxu0 0.0
  %67 = vmatprep.subr.mxu0 0.0
  %68 = vmatpush1.msra.mxu0 0.0
  %69 = vmatprep.subr.mxu0 0.0
  %70 = vmatpush1.msra.mxu0 0.0
  %71 = vmatprep.subr.mxu0 0.0
  %72 = vmatpush1.msra.mxu0 0.0
  %73 = vmatprep.subr.mxu0 0.0
  %74 = vmatpush1.msra.mxu0 0.0
  %75 = vmatprep.subr.mxu0 0.0
  %76 = vmatpush1.msra.mxu0 0.0
  %77 = vmatprep.subr.mxu0 0.0
  %78 = vmatpush1.msra.mxu0 0.0
  %79 = vmatprep.subr.mxu0 0.0
  %80 = vmatpush1.msra.mxu0 0.0
  %81 = vmatprep.subr.mxu0 0.0
  %82 = vmatpush1.msra.mxu0 %v49
  %83 = vmatprep.subr.mxu0 0.0
  %84 = vmatpush1.msra.mxu0 %v48
  %85 = vmatprep.subr.mxu0 0.0
  %86 = vmatpush1.msra.mxu0 %v47
  %87 = vmatprep.subr.mxu0 0.0
  %88 = vmatpush1.msra.mxu0 %v46
  %89 = vmatprep.subr.mxu0 0.0
  %90 = vmatpush2.msra.mxu0 0.0
  %91 = vmatprep.subr.mxu0 0.0
  %92 = vmatpush2.msra.mxu0 0.0
  %93 = vmatprep.subr.mxu0 0.0
  %94 = vmatpush2.msra.mxu0 0.0
  %95 = vmatprep.subr.mxu0 0.0
  %96 = vmatpush2.msra.mxu0 0.0
  %97 = vmatprep.subr.mxu0 0.0
  %98 = vmatpush2.msra.mxu0 0.0
  %99 = vmatprep.subr.mxu0 0.0
  %100 = vmatpush2.msra.mxu0 0.0
  %101 = vmatprep.subr.mxu0 0.0
  %102 = vmatpush2.msra.mxu0 0.0
  %103 = vmatprep.subr.mxu0 0.0
  %104 = vmatpush2.msra.mxu0 0.0
  %105 = vmatprep.subr.mxu0 0.0
  %106 = vmatpush2.msra.mxu0 0.0
  %107 = vmatprep.subr.mxu0 0.0
  %108 = vmatpush2.msra.mxu0 0.0
  %109 = vmatprep.subr.mxu0 0.0
  %110 = vmatpush2.msra.mxu0 0.0
  %111 = vmatprep.subr.mxu0 0.0
  %112 = vmatpush2.msra.mxu0 0.0
  %113 = vmatprep.subr.mxu0 0.0
  %114 = vmatpush2.msra.mxu0 0.0
  %115 = vmatprep.subr.mxu0 0.0
  %116 = vmatpush2.msra.mxu0 0.0
  %117 = vmatprep.subr.mxu0 0.0
  %118 = vmatpush2.msra.mxu0 0.0
  %119 = vmatprep.subr.mxu0 0.0
  %120 = vmatpush2.msra.mxu0 0.0
  %121 = vmatprep.mubr.f32.mxu0 0.0
  %122 = vmatmul.mubr.f32.gmra.mxu0 %v52
  %v123 = vpop.f32.mrf.mxu0
  %v124 = vadd.f32 0.0, %v123
  %v125 = vpop.f32.mrf.mxu0
  %126 = vmatprep.mubr.f32.mxu0 0.0
  %127 = vmatmul.mubr.f32.gmra.mxu0 %v55
  %v128 = vpop.f32.mrf.mxu0
  %v129 = vadd.f32 0.0, %v128
  %v130 = vpop.f32.mrf.mxu0
  %131 = vdwg.mxu0
  %v132 = vld [vmem:[%s2] sm:$0xff]
  %v133 = vld [vmem:[%s2 + $0x8] sm:$0xff]
  %v134 = vld [vmem:[%s2 + $0x10] sm:$0xff]
  %v135 = vld [vmem:[%s2 + $0x18] sm:$0xff]
  %v136 = vld [vmem:[%s2 + $0x20] sm:$0xf]
  %vm137 = vcmask 130048
  %v139 = vsel %vm137, %v132, 0
  %v142 = vsel %vm137, %v133, 0
  %v145 = vsel %vm137, %v134, 0
  %v148 = vsel %vm137, %v135, 0
  %v151 = vsel %vm137, %v136, 0
  %153 = vmatprep.subr.mxu0 0.0
  %154 = vmatpush1.msra.mxu0 0.0
  %155 = vmatprep.subr.mxu0 0.0
  %156 = vmatpush1.msra.mxu0 0.0
  %157 = vmatprep.subr.mxu0 0.0
  %158 = vmatpush1.msra.mxu0 0.0
  %159 = vmatprep.subr.mxu0 0.0
  %160 = vmatpush1.msra.mxu0 0.0
  %161 = vmatprep.subr.mxu0 0.0
  %162 = vmatpush1.msra.mxu0 0.0
  %163 = vmatprep.subr.mxu0 0.0
  %164 = vmatpush1.msra.mxu0 0.0
  %165 = vmatprep.subr.mxu0 0.0
  %166 = vmatpush1.msra.mxu0 0.0
  %167 = vmatprep.subr.mxu0 0.0
  %168 = vmatpush1.msra.mxu0 0.0
  %169 = vmatprep.subr.mxu0 0.0
  %170 = vmatpush1.msra.mxu0 0.0
  %171 = vmatprep.subr.mxu0 0.0
  %172 = vmatpush1.msra.mxu0 0.0
  %173 = vmatprep.subr.mxu0 0.0
  %174 = vmatpush1.msra.mxu0 0.0
  %175 = vmatprep.subr.mxu0 0.0
  %176 = vmatpush1.msra.mxu0 0.0
  %177 = vmatprep.subr.mxu0 0.0
  %178 = vmatpush1.msra.mxu0 0.0
  %179 = vmatprep.subr.mxu0 0.0
  %180 = vmatpush1.msra.mxu0 0.0
  %181 = vmatprep.subr.mxu0 0.0
  %182 = vmatpush1.msra.mxu0 %v129
  %183 = vmatprep.subr.mxu0 0.0
  %184 = vmatpush1.msra.mxu0 %v124
  %185 = vmatprep.subr.mxu0 0.0
  %186 = vmatpush2.msra.mxu0 0.0
  %187 = vmatprep.subr.mxu0 0.0
  %188 = vmatpush2.msra.mxu0 0.0
  %189 = vmatprep.subr.mxu0 0.0
  %190 = vmatpush2.msra.mxu0 0.0
  %191 = vmatprep.subr.mxu0 0.0
  %192 = vmatpush2.msra.mxu0 0.0
  %193 = vmatprep.subr.mxu0 0.0
  %194 = vmatpush2.msra.mxu0 0.0
  %195 = vmatprep.subr.mxu0 0.0
  %196 = vmatpush2.msra.mxu0 0.0
  %197 = vmatprep.subr.mxu0 0.0
  %198 = vmatpush2.msra.mxu0 0.0
  %199 = vmatprep.subr.mxu0 0.0
  %200 = vmatpush2.msra.mxu0 0.0
  %201 = vmatprep.subr.mxu0 0.0
  %202 = vmatpush2.msra.mxu0 0.0
  %203 = vmatprep.subr.mxu0 0.0
  %204 = vmatpush2.msra.mxu0 0.0
  %205 = vmatprep.subr.mxu0 0.0
  %206 = vmatpush2.msra.mxu0 0.0
  %207 = vmatprep.subr.mxu0 0.0
  %208 = vmatpush2.msra.mxu0 0.0
  %209 = vmatprep.subr.mxu0 0.0
  %210 = vmatpush2.msra.mxu0 0.0
  %211 = vmatprep.subr.mxu0 0.0
  %212 = vmatpush2.msra.mxu0 0.0
  %213 = vmatprep.subr.mxu0 0.0
  %214 = vmatpush2.msra.mxu0 0.0
  %215 = vmatprep.subr.mxu0 0.0
  %216 = vmatpush2.msra.mxu0 0.0
  %217 = vmatprep.mubr.f32.mxu0 0.0
  %218 = vmatmul.mubr.f32.gmra.mxu0 %v139
  %v219 = vpop.f32.mrf.mxu0
  %v220 = vadd.f32 0.0, %v219
  %v221 = vpop.f32.mrf.mxu0
  %222 = vmatprep.mubr.f32.mxu0 0.0
  %223 = vmatmul.mubr.f32.gmra.mxu0 %v142
  %v224 = vpop.f32.mrf.mxu0
  %v225 = vadd.f32 0.0, %v224
  %v226 = vpop.f32.mrf.mxu0
  %227 = vmatprep.mubr.f32.mxu0 0.0
  %228 = vmatmul.mubr.f32.gmra.mxu0 %v145
  %v229 = vpop.f32.mrf.mxu0
  %v230 = vadd.f32 0.0, %v229
  %v231 = vpop.f32.mrf.mxu0
  %232 = vmatprep.mubr.f32.mxu0 0.0
  %233 = vmatmul.mubr.f32.gmra.mxu0 %v148
  %v234 = vpop.f32.mrf.mxu0
  %v235 = vadd.f32 0.0, %v234
  %v236 = vpop.f32.mrf.mxu0
  %237 = vmatprep.mubr.f32.mxu0 0.0
  %238 = vmatmul.mubr.f32.gmra.mxu0 %v151
  %v239 = vpop.f32.mrf.mxu0
  %v240 = vadd.f32 0.0, %v239
  %v241 = vpop.f32.mrf.mxu0
  %242 = vdwg.mxu0
  %248 = vrot.lane.b32.xlu0 %v220, 64
  %v249 = vpop.permute.xlu0 %248
  %250 = vrot.lane.b32.xlu0 %v225, 64
  %v251 = vpop.permute.xlu0 %250
  %252 = vrot.lane.b32.xlu0 %v230, 64
  %v253 = vpop.permute.xlu0 %252
  %254 = vrot.lane.b32.xlu0 %v235, 64
  %v255 = vpop.permute.xlu0 %254
  %256 = vrot.lane.b32.xlu0 %v240, 64
  %v257 = vpop.permute.xlu0 %256
  %vm263 = vcmask 1048064
  %264 = vst.msk [vmem:[#allocation2] sm:$0xff] %vm263, %v249
  %265 = vst.msk [vmem:[#allocation2 + $0x8] sm:$0xff] %vm263, %v251
  %266 = vst.msk [vmem:[#allocation2 + $0x10] sm:$0xff] %vm263, %v253
  %267 = vst.msk [vmem:[#allocation2 + $0x18] sm:$0xff] %vm263, %v255
  %vm268 = vcmask 1043968
  %269 = vst.msk [vmem:[#allocation2 + $0x20] sm:$0xf] %vm268, %v257
  %v270 = vld [vmem:[%s1] sm:$0xff]
  %v271 = vld [vmem:[%s1 + $0x8] sm:$0xff]
  %vm272 = vcmask 523264
  %273 = vst.msk [vmem:[#allocation2 + $0x1] sm:$0xff] %vm272, %v270
  %274 = vst.msk [vmem:[#allocation2 + $0x9] sm:$0xff] %vm272, %v271
  %s275 = scalar_lea.vmem %s1, 16
  %v276 = vld [vmem:[%s275] sm:$0xff]
  %v277 = vld [vmem:[%s275 + $0x8] sm:$0xff]
  %278 = vst.msk [vmem:[#allocation2 + $0x13] sm:$0xff] %vm272, %v276
  %279 = vst.msk [vmem:[#allocation2 + $0x1b] sm:$0xff] %vm272, %v277
  %v280 = vld [vmem:[#allocation2] sm:$0xff]
  %v281 = vld [vmem:[#allocation2 + $0x8] sm:$0xff]
  %v282 = vld [vmem:[#allocation2 + $0x10] sm:$0xff]
  %v283 = vld [vmem:[#allocation2 + $0x18] sm:$0xff]
  %v284 = vld [vmem:[#allocation2 + $0x20] sm:$0x3]
  %v285 = vpack.c.bf16 %v281, %v280
  %v286 = vpack.c.bf16 %v283, %v282
  %v287 = vpack.c.bf16 %v284, %v284
  %v288 = vld [vmem:[%s4] sm:$0xf]
  %v289 = vld [vmem:[%s4 + $0x4] sm:$0xf]
  %v290 = vld [vmem:[%s4 + $0x8] sm:$0xf]
  %v291 = vld [vmem:[%s4 + $0xc] sm:$0xf]
  %v292 = vld [vmem:[%s4 + $0x10] sm:$0xf]
  %v293 = vld [vmem:[%s4 + $0x14] sm:$0xf]
  %v294 = vld [vmem:[%s4 + $0x18] sm:$0xf]
  %v295 = vld [vmem:[%s4 + $0x1c] sm:$0xf]
  %v296 = vld [vmem:[%s4 + $0x20] sm:$0xf]
  %v297 = vld [vmem:[%s4 + $0x24] sm:$0xf]
  %v298 = vld [vmem:[%s4 + $0x28] sm:$0xf]
  %v299 = vld [vmem:[%s4 + $0x2c] sm:$0xf]
  %v300 = vld [vmem:[%s4 + $0x30] sm:$0xf]
  %v301 = vld [vmem:[%s4 + $0x34] sm:$0xf]
  %v302 = vld [vmem:[%s4 + $0x38] sm:$0xf]
  %v303 = vld [vmem:[%s4 + $0x3c] sm:$0xf]
  %v304 = vld [vmem:[%s6] sm:$0x1]
  %v306 = vlaneseq
  %v307 = vshrl.u32 %v306, 7
  %v308 = vsub.s32 0, %v307
  %v309 = vrot.slane %v304, %v308
  %v327 = vunpack.c.l.b16 %v288
  %v328 = vunpack.c.l.b16 %v289
  %v329 = vunpack.c.l.b16 %v290
  %v330 = vunpack.c.l.b16 %v291
  %v331 = vunpack.c.l.b16 %v292
  %v332 = vunpack.c.l.b16 %v293
  %v333 = vunpack.c.l.b16 %v294
  %v334 = vunpack.c.l.b16 %v295
  %v335 = vunpack.c.l.b16 %v296
  %v336 = vunpack.c.l.b16 %v297
  %v337 = vunpack.c.l.b16 %v298
  %v338 = vunpack.c.l.b16 %v299
  %v339 = vunpack.c.l.b16 %v300
  %v340 = vunpack.c.l.b16 %v301
  %v341 = vunpack.c.l.b16 %v302
  %v342 = vunpack.c.l.b16 %v303
  %v343 = vpack.c.b16 %v328, %v327
  %v344 = vpack.c.b16 %v330, %v329
  %v345 = vpack.c.b16 %v332, %v331
  %v346 = vpack.c.b16 %v334, %v333
  %v347 = vpack.c.b16 %v336, %v335
  %v348 = vpack.c.b16 %v338, %v337
  %v349 = vpack.c.b16 %v340, %v339
  %v350 = vpack.c.b16 %v342, %v341
  %359 = vmatprep.subr.bf16.mxu0 0
  %360 = vmatpush1.bf16.msra.mxu0 %v350
  %361 = vmatprep.subr.bf16.mxu0 0
  %362 = vmatpush1.bf16.msra.mxu0 %v349
  %363 = vmatprep.subr.bf16.mxu0 0
  %364 = vmatpush1.bf16.msra.mxu0 %v348
  %365 = vmatprep.subr.bf16.mxu0 0
  %366 = vmatpush1.bf16.msra.mxu0 %v347
  %367 = vmatprep.subr.bf16.mxu0 0
  %368 = vmatpush1.bf16.msra.mxu0 %v346
  %369 = vmatprep.subr.bf16.mxu0 0
  %370 = vmatpush1.bf16.msra.mxu0 %v345
  %371 = vmatprep.subr.bf16.mxu0 0
  %372 = vmatpush1.bf16.msra.mxu0 %v344
  %373 = vmatprep.subr.bf16.mxu0 0
  %374 = vmatpush1.bf16.msra.mxu0 %v343
  %375 = vmatprep.subr.bf16.mxu0 0
  %376 = vmatpush2.bf16.msra.mxu0 0
  %377 = vmatprep.subr.bf16.mxu0 0
  %378 = vmatpush2.bf16.msra.mxu0 0
  %379 = vmatprep.subr.bf16.mxu0 0
  %380 = vmatpush2.bf16.msra.mxu0 0
  %381 = vmatprep.subr.bf16.mxu0 0
  %382 = vmatpush2.bf16.msra.mxu0 0
  %383 = vmatprep.subr.bf16.mxu0 0
  %384 = vmatpush2.bf16.msra.mxu0 0
  %385 = vmatprep.subr.bf16.mxu0 0
  %386 = vmatpush2.bf16.msra.mxu0 0
  %387 = vmatprep.subr.bf16.mxu0 0
  %388 = vmatpush2.bf16.msra.mxu0 0
  %389 = vmatprep.subr.bf16.mxu0 0
  %390 = vmatpush2.bf16.msra.mxu0 0
  %391 = vmatprep.mubr.bf16.mxu0 0
  %392 = vmatmul.mubr.bf16.gmra.mxu0 %v285
  %v393 = vpop.f32.mrf.mxu0
  %v394 = vadd.f32 %v309, %v393
  %v395 = vpop.f32.mrf.mxu0
  %v396 = vpop.f32.mrf.mxu0
  %v397 = vadd.f32 %v309, %v396
  %v398 = vpop.f32.mrf.mxu0
  %399 = vmatprep.mubr.bf16.mxu0 0
  %400 = vmatmul.mubr.bf16.gmra.mxu0 %v286
  %v401 = vpop.f32.mrf.mxu0
  %v402 = vadd.f32 %v309, %v401
  %v403 = vpop.f32.mrf.mxu0
  %v404 = vpop.f32.mrf.mxu0
  %v405 = vadd.f32 %v309, %v404
  %v406 = vpop.f32.mrf.mxu0
  %407 = vmatprep.mubr.bf16.mxu0 0
  %408 = vmatmul.mubr.bf16.gmra.mxu0 %v287
  %v409 = vpop.f32.mrf.mxu0
  %v410 = vadd.f32 %v309, %v409
  %v411 = vpop.f32.mrf.mxu0
  %v412 = vpop.f32.mrf.mxu0
  %v413 = vpop.f32.mrf.mxu0
  %414 = vdwg.mxu0
  %v415 = vld [vmem:[#allocation2 + $0x1] sm:$0xff]
  %v416 = vld [vmem:[#allocation2 + $0x9] sm:$0xff]
  %v417 = vld [vmem:[#allocation2 + $0x11] sm:$0xff]
  %v418 = vld [vmem:[#allocation2 + $0x19] sm:$0xff]
  %v419 = vld [vmem:[#allocation2 + $0x21] sm:$0x3]
  %v420 = vpack.c.bf16 %v416, %v415
  %v421 = vpack.c.bf16 %v418, %v417
  %v422 = vpack.c.bf16 %v419, %v419
  %s423 = scalar_lea.vmem %s4, 64
  %v424 = vld [vmem:[%s423] sm:$0xf]
  %v425 = vld [vmem:[%s423 + $0x4] sm:$0xf]
  %v426 = vld [vmem:[%s423 + $0x8] sm:$0xf]
  %v427 = vld [vmem:[%s423 + $0xc] sm:$0xf]
  %v428 = vld [vmem:[%s423 + $0x10] sm:$0xf]
  %v429 = vld [vmem:[%s423 + $0x14] sm:$0xf]
  %v430 = vld [vmem:[%s423 + $0x18] sm:$0xf]
  %v431 = vld [vmem:[%s423 + $0x1c] sm:$0xf]
  %v432 = vld [vmem:[%s423 + $0x20] sm:$0xf]
  %v433 = vld [vmem:[%s423 + $0x24] sm:$0xf]
  %v434 = vld [vmem:[%s423 + $0x28] sm:$0xf]
  %v435 = vld [vmem:[%s423 + $0x2c] sm:$0xf]
  %v436 = vld [vmem:[%s423 + $0x30] sm:$0xf]
  %v437 = vld [vmem:[%s423 + $0x34] sm:$0xf]
  %v438 = vld [vmem:[%s423 + $0x38] sm:$0xf]
  %v439 = vld [vmem:[%s423 + $0x3c] sm:$0xf]
  %v456 = vunpack.c.l.b16 %v424
  %v457 = vunpack.c.l.b16 %v425
  %v458 = vunpack.c.l.b16 %v426
  %v459 = vunpack.c.l.b16 %v427
  %v460 = vunpack.c.l.b16 %v428
  %v461 = vunpack.c.l.b16 %v429
  %v462 = vunpack.c.l.b16 %v430
  %v463 = vunpack.c.l.b16 %v431
  %v464 = vunpack.c.l.b16 %v432
  %v465 = vunpack.c.l.b16 %v433
  %v466 = vunpack.c.l.b16 %v434
  %v467 = vunpack.c.l.b16 %v435
  %v468 = vunpack.c.l.b16 %v436
  %v469 = vunpack.c.l.b16 %v437
  %v470 = vunpack.c.l.b16 %v438
  %v471 = vunpack.c.l.b16 %v439
  %v472 = vpack.c.b16 %v457, %v456
  %v473 = vpack.c.b16 %v459, %v458
  %v474 = vpack.c.b16 %v461, %v460
  %v475 = vpack.c.b16 %v463, %v462
  %v476 = vpack.c.b16 %v465, %v464
  %v477 = vpack.c.b16 %v467, %v466
  %v478 = vpack.c.b16 %v469, %v468
  %v479 = vpack.c.b16 %v471, %v470
  %488 = vmatprep.subr.bf16.mxu0 0
  %489 = vmatpush1.bf16.msra.mxu0 %v479
  %490 = vmatprep.subr.bf16.mxu0 0
  %491 = vmatpush1.bf16.msra.mxu0 %v478
  %492 = vmatprep.subr.bf16.mxu0 0
  %493 = vmatpush1.bf16.msra.mxu0 %v477
  %494 = vmatprep.subr.bf16.mxu0 0
  %495 = vmatpush1.bf16.msra.mxu0 %v476
  %496 = vmatprep.subr.bf16.mxu0 0
  %497 = vmatpush1.bf16.msra.mxu0 %v475
  %498 = vmatprep.subr.bf16.mxu0 0
  %499 = vmatpush1.bf16.msra.mxu0 %v474
  %500 = vmatprep.subr.bf16.mxu0 0
  %501 = vmatpush1.bf16.msra.mxu0 %v473
  %502 = vmatprep.subr.bf16.mxu0 0
  %503 = vmatpush1.bf16.msra.mxu0 %v472
  %504 = vmatprep.subr.bf16.mxu0 0
  %505 = vmatpush2.bf16.msra.mxu0 0
  %506 = vmatprep.subr.bf16.mxu0 0
  %507 = vmatpush2.bf16.msra.mxu0 0
  %508 = vmatprep.subr.bf16.mxu0 0
  %509 = vmatpush2.bf16.msra.mxu0 0
  %510 = vmatprep.subr.bf16.mxu0 0
  %511 = vmatpush2.bf16.msra.mxu0 0
  %512 = vmatprep.subr.bf16.mxu0 0
  %513 = vmatpush2.bf16.msra.mxu0 0
  %514 = vmatprep.subr.bf16.mxu0 0
  %515 = vmatpush2.bf16.msra.mxu0 0
  %516 = vmatprep.subr.bf16.mxu0 0
  %517 = vmatpush2.bf16.msra.mxu0 0
  %518 = vmatprep.subr.bf16.mxu0 0
  %519 = vmatpush2.bf16.msra.mxu0 0
  %520 = vmatprep.mubr.bf16.mxu0 0
  %521 = vmatmul.mubr.bf16.gmra.mxu0 %v420
  %v522 = vpop.f32.mrf.mxu0
  %v523 = vadd.f32 0.0, %v522
  %v524 = vpop.f32.mrf.mxu0
  %v525 = vpop.f32.mrf.mxu0
  %v526 = vadd.f32 0.0, %v525
  %v527 = vpop.f32.mrf.mxu0
  %528 = vmatprep.mubr.bf16.mxu0 0
  %529 = vmatmul.mubr.bf16.gmra.mxu0 %v421
  %v530 = vpop.f32.mrf.mxu0
  %v531 = vadd.f32 0.0, %v530
  %v532 = vpop.f32.mrf.mxu0
  %v533 = vpop.f32.mrf.mxu0
  %v534 = vadd.f32 0.0, %v533
  %v535 = vpop.f32.mrf.mxu0
  %536 = vmatprep.mubr.bf16.mxu0 0
  %537 = vmatmul.mubr.bf16.gmra.mxu0 %v422
  %v538 = vpop.f32.mrf.mxu0
  %v539 = vadd.f32 0.0, %v538
  %v540 = vpop.f32.mrf.mxu0
  %v541 = vpop.f32.mrf.mxu0
  %v542 = vpop.f32.mrf.mxu0
  %543 = vdwg.mxu0
  %v544 = vadd.f32 %v394, %v523
  %v545 = vadd.f32 %v397, %v526
  %v546 = vadd.f32 %v402, %v531
  %v547 = vadd.f32 %v405, %v534
  %v548 = vadd.f32 %v410, %v539
  %v549 = vld [vmem:[#allocation2 + $0x2] sm:$0xff]
  %v550 = vld [vmem:[#allocation2 + $0xa] sm:$0xff]
  %v551 = vld [vmem:[#allocation2 + $0x12] sm:$0xff]
  %v552 = vld [vmem:[#allocation2 + $0x1a] sm:$0xff]
  %v553 = vld [vmem:[#allocation2 + $0x22] sm:$0x3]
  %v554 = vpack.c.bf16 %v550, %v549
  %v555 = vpack.c.bf16 %v552, %v551
  %v556 = vpack.c.bf16 %v553, %v553
  %s557 = scalar_lea.vmem %s4, 128
  %v558 = vld [vmem:[%s557] sm:$0xf]
  %v559 = vld [vmem:[%s557 + $0x4] sm:$0xf]
  %v560 = vld [vmem:[%s557 + $0x8] sm:$0xf]
  %v561 = vld [vmem:[%s557 + $0xc] sm:$0xf]
  %v562 = vld [vmem:[%s557 + $0x10] sm:$0xf]
  %v563 = vld [vmem:[%s557 + $0x14] sm:$0xf]
  %v564 = vld [vmem:[%s557 + $0x18] sm:$0xf]
  %v565 = vld [vmem:[%s557 + $0x1c] sm:$0xf]
  %v566 = vld [vmem:[%s557 + $0x20] sm:$0xf]
  %v567 = vld [vmem:[%s557 + $0x24] sm:$0xf]
  %v568 = vld [vmem:[%s557 + $0x28] sm:$0xf]
  %v569 = vld [vmem:[%s557 + $0x2c] sm:$0xf]
  %v570 = vld [vmem:[%s557 + $0x30] sm:$0xf]
  %v571 = vld [vmem:[%s557 + $0x34] sm:$0xf]
  %v572 = vld [vmem:[%s557 + $0x38] sm:$0xf]
  %v573 = vld [vmem:[%s557 + $0x3c] sm:$0xf]
  %v590 = vunpack.c.l.b16 %v558
  %v591 = vunpack.c.l.b16 %v559
  %v592 = vunpack.c.l.b16 %v560
  %v593 = vunpack.c.l.b16 %v561
  %v594 = vunpack.c.l.b16 %v562
  %v595 = vunpack.c.l.b16 %v563
  %v596 = vunpack.c.l.b16 %v564
  %v597 = vunpack.c.l.b16 %v565
  %v598 = vunpack.c.l.b16 %v566
  %v599 = vunpack.c.l.b16 %v567
  %v600 = vunpack.c.l.b16 %v568
  %v601 = vunpack.c.l.b16 %v569
  %v602 = vunpack.c.l.b16 %v570
  %v603 = vunpack.c.l.b16 %v571
  %v604 = vunpack.c.l.b16 %v572
  %v605 = vunpack.c.l.b16 %v573
  %v606 = vpack.c.b16 %v591, %v590
  %v607 = vpack.c.b16 %v593, %v592
  %v608 = vpack.c.b16 %v595, %v594
  %v609 = vpack.c.b16 %v597, %v596
  %v610 = vpack.c.b16 %v599, %v598
  %v611 = vpack.c.b16 %v601, %v600
  %v612 = vpack.c.b16 %v603, %v602
  %v613 = vpack.c.b16 %v605, %v604
  %622 = vmatprep.subr.bf16.mxu0 0
  %623 = vmatpush1.bf16.msra.mxu0 %v613
  %624 = vmatprep.subr.bf16.mxu0 0
  %625 = vmatpush1.bf16.msra.mxu0 %v612
  %626 = vmatprep.subr.bf16.mxu0 0
  %627 = vmatpush1.bf16.msra.mxu0 %v611
  %628 = vmatprep.subr.bf16.mxu0 0
  %629 = vmatpush1.bf16.msra.mxu0 %v610
  %630 = vmatprep.subr.bf16.mxu0 0
  %631 = vmatpush1.bf16.msra.mxu0 %v609
  %632 = vmatprep.subr.bf16.mxu0 0
  %633 = vmatpush1.bf16.msra.mxu0 %v608
  %634 = vmatprep.subr.bf16.mxu0 0
  %635 = vmatpush1.bf16.msra.mxu0 %v607
  %636 = vmatprep.subr.bf16.mxu0 0
  %637 = vmatpush1.bf16.msra.mxu0 %v606
  %638 = vmatprep.subr.bf16.mxu0 0
  %639 = vmatpush2.bf16.msra.mxu0 0
  %640 = vmatprep.subr.bf16.mxu0 0
  %641 = vmatpush2.bf16.msra.mxu0 0
  %642 = vmatprep.subr.bf16.mxu0 0
  %643 = vmatpush2.bf16.msra.mxu0 0
  %644 = vmatprep.subr.bf16.mxu0 0
  %645 = vmatpush2.bf16.msra.mxu0 0
  %646 = vmatprep.subr.bf16.mxu0 0
  %647 = vmatpush2.bf16.msra.mxu0 0
  %648 = vmatprep.subr.bf16.mxu0 0
  %649 = vmatpush2.bf16.msra.mxu0 0
  %650 = vmatprep.subr.bf16.mxu0 0
  %651 = vmatpush2.bf16.msra.mxu0 0
  %652 = vmatprep.subr.bf16.mxu0 0
  %653 = vmatpush2.bf16.msra.mxu0 0
  %654 = vmatprep.mubr.bf16.mxu0 0
  %655 = vmatmul.mubr.bf16.gmra.mxu0 %v554
  %v656 = vpop.f32.mrf.mxu0
  %v657 = vadd.f32 0.0, %v656
  %v658 = vpop.f32.mrf.mxu0
  %v659 = vpop.f32.mrf.mxu0
  %v660 = vadd.f32 0.0, %v659
  %v661 = vpop.f32.mrf.mxu0
  %662 = vmatprep.mubr.bf16.mxu0 0
  %663 = vmatmul.mubr.bf16.gmra.mxu0 %v555
  %v664 = vpop.f32.mrf.mxu0
  %v665 = vadd.f32 0.0, %v664
  %v666 = vpop.f32.mrf.mxu0
  %v667 = vpop.f32.mrf.mxu0
  %v668 = vadd.f32 0.0, %v667
  %v669 = vpop.f32.mrf.mxu0
  %670 = vmatprep.mubr.bf16.mxu0 0
  %671 = vmatmul.mubr.bf16.gmra.mxu0 %v556
  %v672 = vpop.f32.mrf.mxu0
  %v673 = vadd.f32 0.0, %v672
  %v674 = vpop.f32.mrf.mxu0
  %v675 = vpop.f32.mrf.mxu0
  %v676 = vpop.f32.mrf.mxu0
  %677 = vdwg.mxu0
  %v678 = vadd.f32 %v544, %v657
  %v679 = vadd.f32 %v545, %v660
  %v680 = vadd.f32 %v546, %v665
  %v681 = vadd.f32 %v547, %v668
  %v682 = vadd.f32 %v548, %v673
  %vm683 = vcmp.ge.f32.partialorder %v678, 0.0
  %vm684 = vcmp.ge.f32.partialorder %v679, 0.0
  %vm685 = vcmp.ge.f32.partialorder %v680, 0.0
  %vm686 = vcmp.ge.f32.partialorder %v681, 0.0
  %vm687 = vcmp.ge.f32.partialorder %v682, 0.0
  %v688 = vmul.f32 %v678, 0.1
  %v689 = vmul.f32 %v679, 0.1
  %v690 = vmul.f32 %v680, 0.1
  %v691 = vmul.f32 %v681, 0.1
  %v692 = vmul.f32 %v682, 0.1
  %v693 = vsel %vm683, %v678, %v688
  %v694 = vsel %vm684, %v679, %v689
  %v695 = vsel %vm685, %v680, %v690
  %v696 = vsel %vm686, %v681, %v691
  %v697 = vsel %vm687, %v682, %v692
  %698 = vst [vmem:[#allocation3 + $0x1] sm:$0xff] %v693
  %699 = vst [vmem:[#allocation3 + $0x9] sm:$0xff] %v694
  %700 = vst [vmem:[#allocation3 + $0x11] sm:$0xfc] %v695
  %701 = vst [vmem:[#allocation3 + $0x19] sm:$0xff] %v696
  %702 = vst [vmem:[#allocation3 + $0x21] sm:$0x3] %v697
  %v703 = vld [vmem:[#allocation3] sm:$0xff]
  %v704 = vld [vmem:[#allocation3 + $0x8] sm:$0xff]
  %v705 = vld [vmem:[#allocation3 + $0x10] sm:$0xff]
  %v706 = vld [vmem:[#allocation3 + $0x18] sm:$0xff]
  %v707 = vld [vmem:[#allocation3 + $0x20] sm:$0x3]
  %v708 = vpack.c.bf16 %v704, %v703
  %v709 = vpack.c.bf16 %v706, %v705
  %v710 = vpack.c.bf16 %v707, %v707
  %v711 = vld [vmem:[%s5] sm:$0xf]
  %v712 = vld [vmem:[%s5 + $0x4] sm:$0xf]
  %v713 = vld [vmem:[%s5 + $0x8] sm:$0xf]
  %v714 = vld [vmem:[%s5 + $0xc] sm:$0xf]
  %v715 = vld [vmem:[%s5 + $0x10] sm:$0xf]
  %v716 = vld [vmem:[%s5 + $0x14] sm:$0xf]
  %v717 = vld [vmem:[%s5 + $0x18] sm:$0xf]
  %v718 = vld [vmem:[%s5 + $0x1c] sm:$0xf]
  %v719 = vld [vmem:[%s5 + $0x20] sm:$0xf]
  %v720 = vld [vmem:[%s5 + $0x24] sm:$0xf]
  %v721 = vld [vmem:[%s5 + $0x28] sm:$0xf]
  %v722 = vld [vmem:[%s5 + $0x2c] sm:$0xf]
  %v723 = vld [vmem:[%s5 + $0x30] sm:$0xf]
  %v724 = vld [vmem:[%s5 + $0x34] sm:$0xf]
  %v725 = vld [vmem:[%s5 + $0x38] sm:$0xf]
  %v726 = vld [vmem:[%s5 + $0x3c] sm:$0xf]
  %v727 = vld [vmem:[%s7] sm:$0x1]
  %v729 = vlaneseq
  %v730 = vshrl.u32 %v729, 7
  %v731 = vsub.s32 0, %v730
  %v732 = vrot.slane %v727, %v731
  %v750 = vunpack.c.l.b16 %v711
  %v751 = vunpack.c.l.b16 %v712
  %v752 = vunpack.c.l.b16 %v713
  %v753 = vunpack.c.l.b16 %v714
  %v754 = vunpack.c.l.b16 %v715
  %v755 = vunpack.c.l.b16 %v716
  %v756 = vunpack.c.l.b16 %v717
  %v757 = vunpack.c.l.b16 %v718
  %v758 = vunpack.c.l.b16 %v719
  %v759 = vunpack.c.l.b16 %v720
  %v760 = vunpack.c.l.b16 %v721
  %v761 = vunpack.c.l.b16 %v722
  %v762 = vunpack.c.l.b16 %v723
  %v763 = vunpack.c.l.b16 %v724
  %v764 = vunpack.c.l.b16 %v725
  %v765 = vunpack.c.l.b16 %v726
  %v766 = vpack.c.b16 %v751, %v750
  %v767 = vpack.c.b16 %v753, %v752
  %v768 = vpack.c.b16 %v755, %v754
  %v769 = vpack.c.b16 %v757, %v756
  %v770 = vpack.c.b16 %v759, %v758
  %v771 = vpack.c.b16 %v761, %v760
  %v772 = vpack.c.b16 %v763, %v762
  %v773 = vpack.c.b16 %v765, %v764
  %782 = vmatprep.subr.bf16.mxu0 0
  %783 = vmatpush1.bf16.msra.mxu0 %v773
  %784 = vmatprep.subr.bf16.mxu0 0
  %785 = vmatpush1.bf16.msra.mxu0 %v772
  %786 = vmatprep.subr.bf16.mxu0 0
  %787 = vmatpush1.bf16.msra.mxu0 %v771
  %788 = vmatprep.subr.bf16.mxu0 0
  %789 = vmatpush1.bf16.msra.mxu0 %v770
  %790 = vmatprep.subr.bf16.mxu0 0
  %791 = vmatpush1.bf16.msra.mxu0 %v769
  %792 = vmatprep.subr.bf16.mxu0 0
  %793 = vmatpush1.bf16.msra.mxu0 %v768
  %794 = vmatprep.subr.bf16.mxu0 0
  %795 = vmatpush1.bf16.msra.mxu0 %v767
  %796 = vmatprep.subr.bf16.mxu0 0
  %797 = vmatpush1.bf16.msra.mxu0 %v766
  %798 = vmatprep.subr.bf16.mxu0 0
  %799 = vmatpush2.bf16.msra.mxu0 0
  %800 = vmatprep.subr.bf16.mxu0 0
  %801 = vmatpush2.bf16.msra.mxu0 0
  %802 = vmatprep.subr.bf16.mxu0 0
  %803 = vmatpush2.bf16.msra.mxu0 0
  %804 = vmatprep.subr.bf16.mxu0 0
  %805 = vmatpush2.bf16.msra.mxu0 0
  %806 = vmatprep.subr.bf16.mxu0 0
  %807 = vmatpush2.bf16.msra.mxu0 0
  %808 = vmatprep.subr.bf16.mxu0 0
  %809 = vmatpush2.bf16.msra.mxu0 0
  %810 = vmatprep.subr.bf16.mxu0 0
  %811 = vmatpush2.bf16.msra.mxu0 0
  %812 = vmatprep.subr.bf16.mxu0 0
  %813 = vmatpush2.bf16.msra.mxu0 0
  %814 = vmatprep.mubr.bf16.mxu0 0
  %815 = vmatmul.mubr.bf16.gmra.mxu0 %v708
  %v816 = vpop.f32.mrf.mxu0
  %v817 = vadd.f32 %v732, %v816
  %v818 = vpop.f32.mrf.mxu0
  %v819 = vpop.f32.mrf.mxu0
  %v820 = vadd.f32 %v732, %v819
  %v821 = vpop.f32.mrf.mxu0
  %822 = vmatprep.mubr.bf16.mxu0 0
  %823 = vmatmul.mubr.bf16.gmra.mxu0 %v709
  %v824 = vpop.f32.mrf.mxu0
  %v825 = vadd.f32 %v732, %v824
  %v826 = vpop.f32.mrf.mxu0
  %v827 = vpop.f32.mrf.mxu0
  %v828 = vadd.f32 %v732, %v827
  %v829 = vpop.f32.mrf.mxu0
  %830 = vmatprep.mubr.bf16.mxu0 0
  %831 = vmatmul.mubr.bf16.gmra.mxu0 %v710
  %v832 = vpop.f32.mrf.mxu0
  %v833 = vadd.f32 %v732, %v832
  %v834 = vpop.f32.mrf.mxu0
  %v835 = vpop.f32.mrf.mxu0
  %v836 = vpop.f32.mrf.mxu0
  %837 = vdwg.mxu0
  %v838 = vld [vmem:[#allocation3 + $0x1] sm:$0xff]
  %v839 = vld [vmem:[#allocation3 + $0x9] sm:$0xff]
  %v840 = vld [vmem:[#allocation3 + $0x11] sm:$0xff]
  %v841 = vld [vmem:[#allocation3 + $0x19] sm:$0xff]
  %v842 = vld [vmem:[#allocation3 + $0x21] sm:$0x3]
  %v843 = vpack.c.bf16 %v839, %v838
  %v844 = vpack.c.bf16 %v841, %v840
  %v845 = vpack.c.bf16 %v842, %v842
  %s846 = scalar_lea.vmem %s5, 64
  %v847 = vld [vmem:[%s846] sm:$0xf]
  %v848 = vld [vmem:[%s846 + $0x4] sm:$0xf]
  %v849 = vld [vmem:[%s846 + $0x8] sm:$0xf]
  %v850 = vld [vmem:[%s846 + $0xc] sm:$0xf]
  %v851 = vld [vmem:[%s846 + $0x10] sm:$0xf]
  %v852 = vld [vmem:[%s846 + $0x14] sm:$0xf]
  %v853 = vld [vmem:[%s846 + $0x18] sm:$0xf]
  %v854 = vld [vmem:[%s846 + $0x1c] sm:$0xf]
  %v855 = vld [vmem:[%s846 + $0x20] sm:$0xf]
  %v856 = vld [vmem:[%s846 + $0x24] sm:$0xf]
  %v857 = vld [vmem:[%s846 + $0x28] sm:$0xf]
  %v858 = vld [vmem:[%s846 + $0x2c] sm:$0xf]
  %v859 = vld [vmem:[%s846 + $0x30] sm:$0xf]
  %v860 = vld [vmem:[%s846 + $0x34] sm:$0xf]
  %v861 = vld [vmem:[%s846 + $0x38] sm:$0xf]
  %v862 = vld [vmem:[%s846 + $0x3c] sm:$0xf]
  %v879 = vunpack.c.l.b16 %v847
  %v880 = vunpack.c.l.b16 %v848
  %v881 = vunpack.c.l.b16 %v849
  %v882 = vunpack.c.l.b16 %v850
  %v883 = vunpack.c.l.b16 %v851
  %v884 = vunpack.c.l.b16 %v852
  %v885 = vunpack.c.l.b16 %v853
  %v886 = vunpack.c.l.b16 %v854
  %v887 = vunpack.c.l.b16 %v855
  %v888 = vunpack.c.l.b16 %v856
  %v889 = vunpack.c.l.b16 %v857
  %v890 = vunpack.c.l.b16 %v858
  %v891 = vunpack.c.l.b16 %v859
  %v892 = vunpack.c.l.b16 %v860
  %v893 = vunpack.c.l.b16 %v861
  %v894 = vunpack.c.l.b16 %v862
  %v895 = vpack.c.b16 %v880, %v879
  %v896 = vpack.c.b16 %v882, %v881
  %v897 = vpack.c.b16 %v884, %v883
  %v898 = vpack.c.b16 %v886, %v885
  %v899 = vpack.c.b16 %v888, %v887
  %v900 = vpack.c.b16 %v890, %v889
  %v901 = vpack.c.b16 %v892, %v891
  %v902 = vpack.c.b16 %v894, %v893
  %911 = vmatprep.subr.bf16.mxu0 0
  %912 = vmatpush1.bf16.msra.mxu0 %v902
  %913 = vmatprep.subr.bf16.mxu0 0
  %914 = vmatpush1.bf16.msra.mxu0 %v901
  %915 = vmatprep.subr.bf16.mxu0 0
  %916 = vmatpush1.bf16.msra.mxu0 %v900
  %917 = vmatprep.subr.bf16.mxu0 0
  %918 = vmatpush1.bf16.msra.mxu0 %v899
  %919 = vmatprep.subr.bf16.mxu0 0
  %920 = vmatpush1.bf16.msra.mxu0 %v898
  %921 = vmatprep.subr.bf16.mxu0 0
  %922 = vmatpush1.bf16.msra.mxu0 %v897
  %923 = vmatprep.subr.bf16.mxu0 0
  %924 = vmatpush1.bf16.msra.mxu0 %v896
  %925 = vmatprep.subr.bf16.mxu0 0
  %926 = vmatpush1.bf16.msra.mxu0 %v895
  %927 = vmatprep.subr.bf16.mxu0 0
  %928 = vmatpush2.bf16.msra.mxu0 0
  %929 = vmatprep.subr.bf16.mxu0 0
  %930 = vmatpush2.bf16.msra.mxu0 0
  %931 = vmatprep.subr.bf16.mxu0 0
  %932 = vmatpush2.bf16.msra.mxu0 0
  %933 = vmatprep.subr.bf16.mxu0 0
  %934 = vmatpush2.bf16.msra.mxu0 0
  %935 = vmatprep.subr.bf16.mxu0 0
  %936 = vmatpush2.bf16.msra.mxu0 0
  %937 = vmatprep.subr.bf16.mxu0 0
  %938 = vmatpush2.bf16.msra.mxu0 0
  %939 = vmatprep.subr.bf16.mxu0 0
  %940 = vmatpush2.bf16.msra.mxu0 0
  %941 = vmatprep.subr.bf16.mxu0 0
  %942 = vmatpush2.bf16.msra.mxu0 0
  %943 = vmatprep.mubr.bf16.mxu0 0
  %944 = vmatmul.mubr.bf16.gmra.mxu0 %v843
  %v945 = vpop.f32.mrf.mxu0
  %v946 = vadd.f32 0.0, %v945
  %v947 = vpop.f32.mrf.mxu0
  %v948 = vpop.f32.mrf.mxu0
  %v949 = vadd.f32 0.0, %v948
  %v950 = vpop.f32.mrf.mxu0
  %951 = vmatprep.mubr.bf16.mxu0 0
  %952 = vmatmul.mubr.bf16.gmra.mxu0 %v844
  %v953 = vpop.f32.mrf.mxu0
  %v954 = vadd.f32 0.0, %v953
  %v955 = vpop.f32.mrf.mxu0
  %v956 = vpop.f32.mrf.mxu0
  %v957 = vadd.f32 0.0, %v956
  %v958 = vpop.f32.mrf.mxu0
  %959 = vmatprep.mubr.bf16.mxu0 0
  %960 = vmatmul.mubr.bf16.gmra.mxu0 %v845
  %v961 = vpop.f32.mrf.mxu0
  %v962 = vadd.f32 0.0, %v961
  %v963 = vpop.f32.mrf.mxu0
  %v964 = vpop.f32.mrf.mxu0
  %v965 = vpop.f32.mrf.mxu0
  %966 = vdwg.mxu0
  %v967 = vadd.f32 %v817, %v946
  %v968 = vadd.f32 %v820, %v949
  %v969 = vadd.f32 %v825, %v954
  %v970 = vadd.f32 %v828, %v957
  %v971 = vadd.f32 %v833, %v962
  %v972 = vld [vmem:[#allocation3 + $0x2] sm:$0xff]
  %v973 = vld [vmem:[#allocation3 + $0xa] sm:$0xff]
  %v974 = vld [vmem:[#allocation3 + $0x12] sm:$0xff]
  %v975 = vld [vmem:[#allocation3 + $0x1a] sm:$0xff]
  %v976 = vld [vmem:[#allocation3 + $0x22] sm:$0x3]
  %v977 = vpack.c.bf16 %v973, %v972
  %v978 = vpack.c.bf16 %v975, %v974
  %v979 = vpack.c.bf16 %v976, %v976
  %s980 = scalar_lea.vmem %s5, 128
  %v981 = vld [vmem:[%s980] sm:$0xf]
  %v982 = vld [vmem:[%s980 + $0x4] sm:$0xf]
  %v983 = vld [vmem:[%s980 + $0x8] sm:$0xf]
  %v984 = vld [vmem:[%s980 + $0xc] sm:$0xf]
  %v985 = vld [vmem:[%s980 + $0x10] sm:$0xf]
  %v986 = vld [vmem:[%s980 + $0x14] sm:$0xf]
  %v987 = vld [vmem:[%s980 + $0x18] sm:$0xf]
  %v988 = vld [vmem:[%s980 + $0x1c] sm:$0xf]
  %v989 = vld [vmem:[%s980 + $0x20] sm:$0xf]
  %v990 = vld [vmem:[%s980 + $0x24] sm:$0xf]
  %v991 = vld [vmem:[%s980 + $0x28] sm:$0xf]
  %v992 = vld [vmem:[%s980 + $0x2c] sm:$0xf]
  %v993 = vld [vmem:[%s980 + $0x30] sm:$0xf]
  %v994 = vld [vmem:[%s980 + $0x34] sm:$0xf]
  %v995 = vld [vmem:[%s980 + $0x38] sm:$0xf]
  %v996 = vld [vmem:[%s980 + $0x3c] sm:$0xf]
  %v1013 = vunpack.c.l.b16 %v981
  %v1014 = vunpack.c.l.b16 %v982
  %v1015 = vunpack.c.l.b16 %v983
  %v1016 = vunpack.c.l.b16 %v984
  %v1017 = vunpack.c.l.b16 %v985
  %v1018 = vunpack.c.l.b16 %v986
  %v1019 = vunpack.c.l.b16 %v987
  %v1020 = vunpack.c.l.b16 %v988
  %v1021 = vunpack.c.l.b16 %v989
  %v1022 = vunpack.c.l.b16 %v990
  %v1023 = vunpack.c.l.b16 %v991
  %v1024 = vunpack.c.l.b16 %v992
  %v1025 = vunpack.c.l.b16 %v993
  %v1026 = vunpack.c.l.b16 %v994
  %v1027 = vunpack.c.l.b16 %v995
  %v1028 = vunpack.c.l.b16 %v996
  %v1029 = vpack.c.b16 %v1014, %v1013
  %v1030 = vpack.c.b16 %v1016, %v1015
  %v1031 = vpack.c.b16 %v1018, %v1017
  %v1032 = vpack.c.b16 %v1020, %v1019
  %v1033 = vpack.c.b16 %v1022, %v1021
  %v1034 = vpack.c.b16 %v1024, %v1023
  %v1035 = vpack.c.b16 %v1026, %v1025
  %v1036 = vpack.c.b16 %v1028, %v1027
  %1045 = vmatprep.subr.bf16.mxu0 0
  %1046 = vmatpush1.bf16.msra.mxu0 %v1036
  %1047 = vmatprep.subr.bf16.mxu0 0
  %1048 = vmatpush1.bf16.msra.mxu0 %v1035
  %1049 = vmatprep.subr.bf16.mxu0 0
  %1050 = vmatpush1.bf16.msra.mxu0 %v1034
  %1051 = vmatprep.subr.bf16.mxu0 0
  %1052 = vmatpush1.bf16.msra.mxu0 %v1033
  %1053 = vmatprep.subr.bf16.mxu0 0
  %1054 = vmatpush1.bf16.msra.mxu0 %v1032
  %1055 = vmatprep.subr.bf16.mxu0 0
  %1056 = vmatpush1.bf16.msra.mxu0 %v1031
  %1057 = vmatprep.subr.bf16.mxu0 0
  %1058 = vmatpush1.bf16.msra.mxu0 %v1030
  %1059 = vmatprep.subr.bf16.mxu0 0
  %1060 = vmatpush1.bf16.msra.mxu0 %v1029
  %1061 = vmatprep.subr.bf16.mxu0 0
  %1062 = vmatpush2.bf16.msra.mxu0 0
  %1063 = vmatprep.subr.bf16.mxu0 0
  %1064 = vmatpush2.bf16.msra.mxu0 0
  %1065 = vmatprep.subr.bf16.mxu0 0
  %1066 = vmatpush2.bf16.msra.mxu0 0
  %1067 = vmatprep.subr.bf16.mxu0 0
  %1068 = vmatpush2.bf16.msra.mxu0 0
  %1069 = vmatprep.subr.bf16.mxu0 0
  %1070 = vmatpush2.bf16.msra.mxu0 0
  %1071 = vmatprep.subr.bf16.mxu0 0
  %1072 = vmatpush2.bf16.msra.mxu0 0
  %1073 = vmatprep.subr.bf16.mxu0 0
  %1074 = vmatpush2.bf16.msra.mxu0 0
  %1075 = vmatprep.subr.bf16.mxu0 0
  %1076 = vmatpush2.bf16.msra.mxu0 0
  %1077 = vmatprep.mubr.bf16.mxu0 0
  %1078 = vmatmul.mubr.bf16.gmra.mxu0 %v977
  %v1079 = vpop.f32.mrf.mxu0
  %v1080 = vadd.f32 0.0, %v1079
  %v1081 = vpop.f32.mrf.mxu0
  %v1082 = vpop.f32.mrf.mxu0
  %v1083 = vadd.f32 0.0, %v1082
  %v1084 = vpop.f32.mrf.mxu0
  %1085 = vmatprep.mubr.bf16.mxu0 0
  %1086 = vmatmul.mubr.bf16.gmra.mxu0 %v978
  %v1087 = vpop.f32.mrf.mxu0
  %v1088 = vadd.f32 0.0, %v1087
  %v1089 = vpop.f32.mrf.mxu0
  %v1090 = vpop.f32.mrf.mxu0
  %v1091 = vadd.f32 0.0, %v1090
  %v1092 = vpop.f32.mrf.mxu0
  %1093 = vmatprep.mubr.bf16.mxu0 0
  %1094 = vmatmul.mubr.bf16.gmra.mxu0 %v979
  %v1095 = vpop.f32.mrf.mxu0
  %v1096 = vadd.f32 0.0, %v1095
  %v1097 = vpop.f32.mrf.mxu0
  %v1098 = vpop.f32.mrf.mxu0
  %v1099 = vpop.f32.mrf.mxu0
  %1100 = vdwg.mxu0
  %v1101 = vadd.f32 %v967, %v1080
  %v1102 = vadd.f32 %v968, %v1083
  %v1103 = vadd.f32 %v969, %v1088
  %v1104 = vadd.f32 %v970, %v1091
  %v1105 = vadd.f32 %v971, %v1096
  %vm1106 = vcmp.ge.f32.partialorder %v1101, 0.0
  %vm1107 = vcmp.ge.f32.partialorder %v1102, 0.0
  %vm1108 = vcmp.ge.f32.partialorder %v1103, 0.0
  %vm1109 = vcmp.ge.f32.partialorder %v1104, 0.0
  %vm1110 = vcmp.ge.f32.partialorder %v1105, 0.0
  %v1111 = vmul.f32 %v1101, 0.1
  %v1112 = vmul.f32 %v1102, 0.1
  %v1113 = vmul.f32 %v1103, 0.1
  %v1114 = vmul.f32 %v1104, 0.1
  %v1115 = vmul.f32 %v1105, 0.1
  %v1116 = vsel %vm1106, %v1101, %v1111
  %v1117 = vsel %vm1107, %v1102, %v1112
  %v1118 = vsel %vm1108, %v1103, %v1113
  %v1119 = vsel %vm1109, %v1104, %v1114
  %v1120 = vsel %vm1110, %v1105, %v1115
  %1121 = vst [vmem:[%s8] sm:$0xff] %v1116
  %1122 = vst [vmem:[%s8 + $0x8] sm:$0xff] %v1117
  %s1123 = scalar_lea.vmem %s8, 16
  %1124 = vst [vmem:[%s1123 - $0x2] sm:$0xfc] %v1118
  %1125 = vst [vmem:[%s1123 + $0x6] sm:$0xff] %v1119
  %1126 = vst [vmem:[%s1123 + $0xe] sm:$0x3] %v1120
  // Predicated region
  $region38: #{up_forward.1} parent=0 // pred_check
    _
  $region39: #{up_forward.1} parent=0 // pred_check_branch
    %1128 = sbr.rel (0) target = $region41
  $region40: #{up_forward.1} parent=0 // pred_region
    _
  $region41: #{up_forward.1} parent=0 // pred_fallthru
    _
  // Predicated region
  $region42: #{up_forward.1} parent=0 // pred_check
    _
  $region43: #{up_forward.1} parent=0 // pred_check_branch
    %1130 = sbr.rel (0) target = $region45
  $region44: #{up_forward.1} parent=0 // pred_region
    _
  $region45: #{up_forward.1} parent=0 // pred_fallthru
    _

</llo_original>
